<compile_context>
chip_gen: v6e
topology: v6e:2x2x1
jax: 0.10.0
libtpu: 0.0.40
codegen_flags: <defaults>
</compile_context>

<pallas_src>
import jax
import jax.numpy as jnp
import numpy as np
from jax.experimental import pallas as pl
from jax.experimental.pallas import tpu as pltpu


# ------------------------------ helpers ------------------------------------

def _vmem_limit_bytes():
    """Scoped-VMEM limit derived from the actual chip (fallback: v7x-safe)."""
    try:
        cap = int(pltpu.get_tpu_info().vmem_capacity_bytes)
    except Exception:
        cap = 64 * 1024 * 1024
    return int(min((cap * 3) // 4, 96 * 1024 * 1024))


def _rows_cap_for_grid(n_rows, n_batch, min_steps=4):
    """Cap the row tile so N * n_row_tiles >= min_steps (feeds v7x's 2 TCs)."""
    per_batch = -(-min_steps // max(1, n_batch))          # ceil
    return max(1, -(-n_rows // per_batch))                # ceil


def _pick_row_tile(n_rows, cap):
    """Pick output-row tile TH: prefer a divisor of n_rows in [cap/2, cap];
    otherwise use TH=cap and pad n_rows up to a multiple (output trimmed)."""
    cap = max(1, min(int(n_rows), int(cap)))
    for d in range(cap, max(1, cap // 2) - 1, -1):
        if n_rows % d == 0:
            return d, n_rows // d, n_rows
    nt = -(-n_rows // cap)
    return cap, nt, nt * cap


# ----------------------------- Pallas kernels -----------------------------

def _conv3x3s2_kernel(x_ref, halo_ref, w_ref, b_ref, out_ref):
    """3x3 / stride-2 conv on a tile of TH output rows.

    x_ref:    (2*TH, Wo+1, 2C)  padded rows 2*r0 .. 2*r0+2*TH-1; last dim packs
                                even columns in lanes [:C], odd columns in [C:].
    halo_ref: (1,    Wo+1, 2C)  padded row 2*(r0+TH) (kh=2 tap of the last row).
    w_ref:    (9, C, C)         per-tap [c_in, c_out] weights.
    b_ref:    (1, C) float32    bias.
    out_ref:  (TH, Wo, C)
    """
    TH, Wo, C = out_ref.shape
    bias = b_ref[...]                                   # (1, C) f32

    def row_output(row_a, row_b, row_c):
        # rows: (Wo+1, 2C); accumulate all 9 taps for one output row in vregs.
        acc = jnp.zeros((Wo, C), jnp.float32)
        for kh, row in enumerate((row_a, row_b, row_c)):
            ev = row[:, :C]                             # even padded columns
            od = row[:, C:]                             # odd padded columns
            acc = acc + jnp.dot(ev[:Wo], w_ref[3 * kh + 0],
                                preferred_element_type=jnp.float32)
            acc = acc + jnp.dot(od[:Wo], w_ref[3 * kh + 1],
                                preferred_element_type=jnp.float32)
            acc = acc + jnp.dot(ev[1:], w_ref[3 * kh + 2],
                                preferred_element_type=jnp.float32)
        return acc + bias

    def body(r, carry):
        out = row_output(x_ref[2 * r], x_ref[2 * r + 1], x_ref[2 * r + 2])
        out_ref[r] = out.astype(out_ref.dtype)
        return carry

    jax.lax.fori_loop(0, TH - 1, body, 0)
    # Last output row of the tile uses the halo row for its kh=2 tap.
    last = row_output(x_ref[2 * (TH - 1)], x_ref[2 * (TH - 1) + 1], halo_ref[0])
    out_ref[TH - 1] = last.astype(out_ref.dtype)


def _avgpool2x2_kernel(x_ref, out_ref):
    """2x2 / stride-2 average pool.

    x_ref:   (2*TH, Wo, 2C)  even/odd columns packed on lanes.
    out_ref: (TH, Wo, C)
    """
    TH, Wo, C = out_ref.shape
    x = x_ref[...].astype(jnp.float32).reshape(TH, 2, Wo, 2 * C)
    s = x[:, 0, :, :C] + x[:, 0, :, C:] + x[:, 1, :, :C] + x[:, 1, :, C:]
    out_ref[...] = (s * 0.25).astype(out_ref.dtype)


# ------------------------------- wrappers ----------------------------------

def _conv_downsample_nhwc(x_nhwc, weight, bias, use_bf16_compute):
    N, H, W, C = x_nhwc.shape
    out_dtype = x_nhwc.dtype
    act_dtype = jnp.bfloat16 if use_bf16_compute else out_dtype
    Ho, Wo = H // 2, W // 2                      # matches pad(0,1,0,1)+conv3 s2

    act_is = jnp.dtype(act_dtype).itemsize
    out_is = jnp.dtype(out_dtype).itemsize

    vmem_limit = _vmem_limit_bytes()
    resident = 2 * 9 * C * C * act_is + 2 * C * 4          # dbl-buffered W + b
    halo = 2 * 2 * (Wo + 1) * C * act_is                   # dbl-buffered halo row
    per_row = 2 * (4 * (Wo + 1) * C * act_is + Wo * C * out_is)
    budget = vmem_limit - resident - halo - (2 << 20)
    cap = max(1, budget // max(1, per_row))
    cap = min(cap, _rows_cap_for_grid(Ho, N))
    th, nh, ho_pad = _pick_row_tile(Ho, cap)

    # Pad bottom/right (torch F.pad(0,1,0,1) plus at most one extra zero row /
    # column so the packed-parity reshape and tile padding stay in-bounds).
    HR = 2 * ho_pad + 1
    WP = 2 * (Wo + 1)
    xa = x_nhwc.astype(act_dtype)
    xp = jnp.pad(xa, ((0, 0), (0, HR - H), (0, WP - W), (0, 0)))
    xcp = xp.reshape(N, HR, Wo + 1, 2 * C)       # free: column parity -> lanes

    # Per-tap weight matrices: (kh, kw) -> [c_in, c_out]; bias stays f32.
    w_taps = jnp.transpose(weight, (2, 3, 1, 0)).reshape(9, C, C).astype(act_dtype)
    b_row = bias.reshape(1, C).astype(jnp.float32)

    two_th = 2 * th
    main_spec = pl.BlockSpec((None, two_th, Wo + 1, 2 * C),
                             lambda n, h: (n, h, 0, 0))
    halo_spec = pl.BlockSpec((None, 1, Wo + 1, 2 * C),
                             lambda n, h: (n, (h + 1) * two_th, 0, 0))

    out = pl.pallas_call(
        _conv3x3s2_kernel,
        out_shape=jax.ShapeDtypeStruct((N, ho_pad, Wo, C), out_dtype),
        grid=(N, nh),
        in_specs=[
            main_spec,
            halo_spec,
            pl.BlockSpec((9, C, C), lambda n, h: (0, 0, 0)),   # resident weights
            pl.BlockSpec((1, C), lambda n, h: (0, 0)),         # resident bias
        ],
        out_specs=pl.BlockSpec((None, th, Wo, C), lambda n, h: (n, h, 0, 0)),
        compiler_params=pltpu.CompilerParams(
            dimension_semantics=("parallel", "parallel"),
            vmem_limit_bytes=vmem_limit),
        cost_estimate=pl.CostEstimate(
            flops=2 * N * Ho * Wo * 9 * C * C,
            transcendentals=0,
            bytes_accessed=int(xcp.size * act_is + 9 * C * C * act_is + C * 4
                               + N * ho_pad * Wo * C * out_is)),
    )(xcp, xcp, w_taps, b_row)

    if ho_pad != Ho:
        out = out[:, :Ho]
    return out


def _avgpool_downsample_nhwc(x_nhwc):
    N, H, W, C = x_nhwc.shape
    dt = x_nhwc.dtype
    its = jnp.dtype(dt).itemsize
    Ho, Wo = H // 2, W // 2                      # avg_pool2d floor semantics

    vmem_limit = _vmem_limit_bytes()
    per_row = 2 * (4 * Wo * C * its + Wo * C * its)
    cap = max(1, (vmem_limit - (2 << 20)) // max(1, per_row))
    cap = min(cap, _rows_cap_for_grid(Ho, N))
    th, nh, ho_pad = _pick_row_tile(Ho, cap)

    xt = x_nhwc[:, :2 * Ho, :2 * Wo, :]          # no-op when H, W are even
    if ho_pad != Ho:
        xt = jnp.pad(xt, ((0, 0), (0, 2 * (ho_pad - Ho)), (0, 0), (0, 0)))
    xcp = xt.reshape(N, 2 * ho_pad, Wo, 2 * C)   # free: column parity -> lanes

    out = pl.pallas_call(
        _avgpool2x2_kernel,
        out_shape=jax.ShapeDtypeStruct((N, ho_pad, Wo, C), dt),
        grid=(N, nh),
        in_specs=[pl.BlockSpec((None, 2 * th, Wo, 2 * C),
                               lambda n, h: (n, h, 0, 0))],
        out_specs=pl.BlockSpec((None, th, Wo, C), lambda n, h: (n, h, 0, 0)),
        compiler_params=pltpu.CompilerParams(
            dimension_semantics=("parallel", "parallel"),
            vmem_limit_bytes=vmem_limit),
    )(xcp)

    if ho_pad != Ho:
        out = out[:, :Ho]
    return out


def downsample_forward(x, weight=None, bias=None, *, with_conv=True, mask=None,
                       use_bf16_compute=True, data_format="NCHW"):
    """Pallas implementation of Downsample.forward (mask=None path).

    x:      (N, C, H, W)  (or (N, H, W, C) with data_format="NHWC")
    weight: (C, C, 3, 3)  float32  (only when with_conv=True)
    bias:   (C,)          float32
    """
    if mask is not None:
        # TODO(synk): masked plm_conv path (leak_area blending) not implemented.
        raise NotImplementedError("mask path not implemented")

    if data_format == "NCHW":
        x_nhwc = jnp.transpose(x, (0, 2, 3, 1))
    elif data_format == "NHWC":
        x_nhwc = x
    else:
        raise ValueError(f"unknown data_format {data_format!r}")

    if with_conv:
        out = _conv_downsample_nhwc(x_nhwc, weight, bias, use_bf16_compute)
    else:
        out = _avgpool_downsample_nhwc(x_nhwc)

    if data_format == "NCHW":
        return jnp.transpose(out, (0, 3, 1, 2))
    return out


# --------------------------------- main ------------------------------------

if __name__ == "__main__":
    key = jax.random.PRNGKey(0)
    kx, kw, kb, kx2 = jax.random.split(key, 4)

    def ref_conv(x, weight, bias):
        xp = jnp.pad(x, ((0, 0), (0, 0), (0, 1), (0, 1)))
        y = jax.lax.conv_general_dilated(
            xp, weight, window_strides=(2, 2), padding="VALID",
            dimension_numbers=("NCHW", "OIHW", "NCHW"),
            precision=jax.lax.Precision.HIGHEST)
        return y + bias.reshape(1, -1, 1, 1)

    def ref_pool(x):
        n, c, h, w = x.shape
        ho, wo = h // 2, w // 2
        return x[:, :, :2 * ho, :2 * wo].reshape(n, c, ho, 2, wo, 2).mean(axis=(3, 5))

    N, C, H, W = 2, 4, 16, 16
    x = jax.random.normal(kx, (N, C, H, W), dtype=jnp.float32)
    weight = jax.random.normal(kw, (C, C, 3, 3), dtype=jnp.float32) * 0.1
    bias = jax.random.normal(kb, (C,), dtype=jnp.float32) * 0.1

    # --- with_conv=True, default bf16 MXU compute (f32 accumulation) ---
    out_bf16 = jax.block_until_ready(
        downsample_forward(x, weight, bias, with_conv=True))
    assert out_bf16.shape == (N, C, H // 2, W // 2), out_bf16.shape
    np.testing.assert_allclose(np.asarray(out_bf16),
                               np.asarray(ref_conv(x, weight, bias)),
                               rtol=5e-2, atol=5e-2)

    # --- with_conv=True, full f32 compute ---
    out_f32 = jax.block_until_ready(
        downsample_forward(x, weight, bias, with_conv=True,
                           use_bf16_compute=False))
    np.testing.assert_allclose(np.asarray(out_f32),
                               np.asarray(ref_conv(x, weight, bias)),
                               rtol=1e-4, atol=1e-4)

    # --- with_conv=False (avg_pool2d 2x2) ---
    out_pool = jax.block_until_ready(downsample_forward(x, with_conv=False))
    np.testing.assert_allclose(np.asarray(out_pool), np.asarray(ref_pool(x)),
                               rtol=1e-5, atol=1e-5)

    # --- odd spatial dims: exercises pad/trim and the TH=1 / halo edge path ---
    x2 = jax.random.normal(kx2, (1, C, 9, 11), dtype=jnp.float32)
    out2 = jax.block_until_ready(
        downsample_forward(x2, weight, bias, with_conv=True,
                           use_bf16_compute=False))
    np.testing.assert_allclose(np.asarray(out2),
                               np.asarray(ref_conv(x2, weight, bias)),
                               rtol=1e-4, atol=1e-4)
    out2p = jax.block_until_ready(downsample_forward(x2, with_conv=False))
    np.testing.assert_allclose(np.asarray(out2p), np.asarray(ref_pool(x2)),
                               rtol=1e-5, atol=1e-5)

    print("KERNEL_OK")
</pallas_src>

<mosaic_0001>
module attributes {stable_mosaic.version = 11 : i64} {
  func.func @_conv3x3s2_kernel(%arg0: i32, %arg1: i32, %arg2: memref<1x8x9x8xbf16, #tpu.memory_space<vmem>>, %arg3: memref<1x1x9x8xbf16, #tpu.memory_space<vmem>>, %arg4: memref<9x4x4xbf16, #tpu.memory_space<vmem>>, %arg5: memref<1x4xf32, #tpu.memory_space<vmem>>, %arg6: memref<1x4x8x4xf32, #tpu.memory_space<vmem>>) attributes {dimension_semantics = [#tpu.dimension_semantics<parallel>, #tpu.dimension_semantics<parallel>], iteration_bounds = array<i64: 2, 2>, scalar_prefetch = 0 : i64, scratch_operands = 0 : i64, tpu.core_type = #tpu.core_type<tc>, window_params = [{transform_indices = @transform_0, window_bounds = array<i64: 1, 8, 9, 8>}, {transform_indices = @transform_1, window_bounds = array<i64: 1, 1, 9, 8>}, {pipeline_mode = #tpu.pipeline_mode<synchronous>, transform_indices = @transform_2, window_bounds = array<i64: 9, 4, 4>}, {pipeline_mode = #tpu.pipeline_mode<synchronous>, transform_indices = @transform_3, window_bounds = array<i64: 1, 4>}, {transform_indices = @transform_4, window_bounds = array<i64: 1, 4, 8, 4>}]} {
    %c0 = arith.constant 0 : index
    %c0_0 = arith.constant 0 : index
    %0 = vector.load %arg5[%c0, %c0_0] : memref<1x4xf32, #tpu.memory_space<vmem>>, vector<1x4xf32>
    %c0_i32 = arith.constant 0 : i32
    %c3_i32 = arith.constant 3 : i32
    %1 = arith.addi %c0_i32, %c3_i32 : i32
    %c1_i32 = arith.constant 1 : i32
    scf.for %arg7 = %c0_i32 to %1 step %c1_i32  : i32 {
      %c2_i32 = arith.constant 2 : i32
      %65 = arith.muli %c2_i32, %arg7 : i32
      %c0_46 = arith.constant 0 : index
      %66 = arith.index_cast %65 : i32 to index
      %c0_47 = arith.constant 0 : index
      %c0_48 = arith.constant 0 : index
      %67 = vector.load %arg2[%c0_46, %66, %c0_47, %c0_48] : memref<1x8x9x8xbf16, #tpu.memory_space<vmem>>, vector<1x1x9x8xbf16>
      %68 = vector.shape_cast %67 : vector<1x1x9x8xbf16> to vector<9x8xbf16>
      %c2_i32_49 = arith.constant 2 : i32
      %69 = arith.muli %c2_i32_49, %arg7 : i32
      %c1_i32_50 = arith.constant 1 : i32
      %70 = arith.addi %69, %c1_i32_50 : i32
      %c0_51 = arith.constant 0 : index
      %71 = arith.index_cast %70 : i32 to index
      %c0_52 = arith.constant 0 : index
      %c0_53 = arith.constant 0 : index
      %72 = vector.load %arg2[%c0_51, %71, %c0_52, %c0_53] : memref<1x8x9x8xbf16, #tpu.memory_space<vmem>>, vector<1x1x9x8xbf16>
      %73 = vector.shape_cast %72 : vector<1x1x9x8xbf16> to vector<9x8xbf16>
      %c2_i32_54 = arith.constant 2 : i32
      %74 = arith.muli %c2_i32_54, %arg7 : i32
      %c2_i32_55 = arith.constant 2 : i32
      %75 = arith.addi %74, %c2_i32_55 : i32
      %c0_56 = arith.constant 0 : index
      %76 = arith.index_cast %75 : i32 to index
      %c0_57 = arith.constant 0 : index
      %c0_58 = arith.constant 0 : index
      %77 = vector.load %arg2[%c0_56, %76, %c0_57, %c0_58] : memref<1x8x9x8xbf16, #tpu.memory_space<vmem>>, vector<1x1x9x8xbf16>
      %78 = vector.shape_cast %77 : vector<1x1x9x8xbf16> to vector<9x8xbf16>
      %cst_59 = arith.constant 0.000000e+00 : f32
      %79 = vector.broadcast %cst_59 : f32 to vector<8x4xf32>
      %80 = vector.extract_strided_slice %68 {offsets = [0, 0], sizes = [9, 4], strides = [1, 1]} : vector<9x8xbf16> to vector<9x4xbf16>
      %81 = vector.extract_strided_slice %68 {offsets = [0, 4], sizes = [9, 4], strides = [1, 1]} : vector<9x8xbf16> to vector<9x4xbf16>
      %82 = vector.extract_strided_slice %80 {offsets = [0, 0], sizes = [8, 4], strides = [1, 1]} : vector<9x4xbf16> to vector<8x4xbf16>
      %c0_60 = arith.constant 0 : index
      %c0_61 = arith.constant 0 : index
      %c0_62 = arith.constant 0 : index
      %83 = vector.load %arg4[%c0_60, %c0_61, %c0_62] : memref<9x4x4xbf16, #tpu.memory_space<vmem>>, vector<1x4x4xbf16>
      %84 = vector.shape_cast %83 : vector<1x4x4xbf16> to vector<4x4xbf16>
      %cst_63 = arith.constant dense<0.000000e+00> : vector<8x4xf32>
      %85 = tpu.matmul %82, %84, %cst_63 {dimension_numbers = #tpu.dot_dimension_numbers<[1], [0], [0], [1], [0, 0, 1, 1], [], []>} : vector<8x4xbf16>, vector<4x4xbf16>, vector<8x4xf32> -> vector<8x4xf32>
      %86 = arith.addf %79, %85 : vector<8x4xf32>
      %87 = vector.extract_strided_slice %81 {offsets = [0, 0], sizes = [8, 4], strides = [1, 1]} : vector<9x4xbf16> to vector<8x4xbf16>
      %c1_64 = arith.constant 1 : index
      %c0_65 = arith.constant 0 : index
      %c0_66 = arith.constant 0 : index
      %88 = vector.load %arg4[%c1_64, %c0_65, %c0_66] : memref<9x4x4xbf16, #tpu.memory_space<vmem>>, vector<1x4x4xbf16>
      %89 = vector.shape_cast %88 : vector<1x4x4xbf16> to vector<4x4xbf16>
      %cst_67 = arith.constant dense<0.000000e+00> : vector<8x4xf32>
      %90 = tpu.matmul %87, %89, %cst_67 {dimension_numbers = #tpu.dot_dimension_numbers<[1], [0], [0], [1], [0, 0, 1, 1], [], []>} : vector<8x4xbf16>, vector<4x4xbf16>, vector<8x4xf32> -> vector<8x4xf32>
      %91 = arith.addf %86, %90 : vector<8x4xf32>
      %92 = vector.extract_strided_slice %80 {offsets = [1, 0], sizes = [8, 4], strides = [1, 1]} : vector<9x4xbf16> to vector<8x4xbf16>
      %c2_68 = arith.constant 2 : index
      %c0_69 = arith.constant 0 : index
      %c0_70 = arith.constant 0 : index
      %93 = vector.load %arg4[%c2_68, %c0_69, %c0_70] : memref<9x4x4xbf16, #tpu.memory_space<vmem>>, vector<1x4x4xbf16>
      %94 = vector.shape_cast %93 : vector<1x4x4xbf16> to vector<4x4xbf16>
      %cst_71 = arith.constant dense<0.000000e+00> : vector<8x4xf32>
      %95 = tpu.matmul %92, %94, %cst_71 {dimension_numbers = #tpu.dot_dimension_numbers<[1], [0], [0], [1], [0, 0, 1, 1], [], []>} : vector<8x4xbf16>, vector<4x4xbf16>, vector<8x4xf32> -> vector<8x4xf32>
      %96 = arith.addf %91, %95 : vector<8x4xf32>
      %97 = vector.extract_strided_slice %73 {offsets = [0, 0], sizes = [9, 4], strides = [1, 1]} : vector<9x8xbf16> to vector<9x4xbf16>
      %98 = vector.extract_strided_slice %73 {offsets = [0, 4], sizes = [9, 4], strides = [1, 1]} : vector<9x8xbf16> to vector<9x4xbf16>
      %99 = vector.extract_strided_slice %97 {offsets = [0, 0], sizes = [8, 4], strides = [1, 1]} : vector<9x4xbf16> to vector<8x4xbf16>
      %c3_72 = arith.constant 3 : index
      %c0_73 = arith.constant 0 : index
      %c0_74 = arith.constant 0 : index
      %100 = vector.load %arg4[%c3_72, %c0_73, %c0_74] : memref<9x4x4xbf16, #tpu.memory_space<vmem>>, vector<1x4x4xbf16>
      %101 = vector.shape_cast %100 : vector<1x4x4xbf16> to vector<4x4xbf16>
      %cst_75 = arith.constant dense<0.000000e+00> : vector<8x4xf32>
      %102 = tpu.matmul %99, %101, %cst_75 {dimension_numbers = #tpu.dot_dimension_numbers<[1], [0], [0], [1], [0, 0, 1, 1], [], []>} : vector<8x4xbf16>, vector<4x4xbf16>, vector<8x4xf32> -> vector<8x4xf32>
      %103 = arith.addf %96, %102 : vector<8x4xf32>
      %104 = vector.extract_strided_slice %98 {offsets = [0, 0], sizes = [8, 4], strides = [1, 1]} : vector<9x4xbf16> to vector<8x4xbf16>
      %c4_76 = arith.constant 4 : index
      %c0_77 = arith.constant 0 : index
      %c0_78 = arith.constant 0 : index
      %105 = vector.load %arg4[%c4_76, %c0_77, %c0_78] : memref<9x4x4xbf16, #tpu.memory_space<vmem>>, vector<1x4x4xbf16>
      %106 = vector.shape_cast %105 : vector<1x4x4xbf16> to vector<4x4xbf16>
      %cst_79 = arith.constant dense<0.000000e+00> : vector<8x4xf32>
      %107 = tpu.matmul %104, %106, %cst_79 {dimension_numbers = #tpu.dot_dimension_numbers<[1], [0], [0], [1], [0, 0, 1, 1], [], []>} : vector<8x4xbf16>, vector<4x4xbf16>, vector<8x4xf32> -> vector<8x4xf32>
      %108 = arith.addf %103, %107 : vector<8x4xf32>
      %109 = vector.extract_strided_slice %97 {offsets = [1, 0], sizes = [8, 4], strides = [1, 1]} : vector<9x4xbf16> to vector<8x4xbf16>
      %c5_80 = arith.constant 5 : index
      %c0_81 = arith.constant 0 : index
      %c0_82 = arith.constant 0 : index
      %110 = vector.load %arg4[%c5_80, %c0_81, %c0_82] : memref<9x4x4xbf16, #tpu.memory_space<vmem>>, vector<1x4x4xbf16>
      %111 = vector.shape_cast %110 : vector<1x4x4xbf16> to vector<4x4xbf16>
      %cst_83 = arith.constant dense<0.000000e+00> : vector<8x4xf32>
      %112 = tpu.matmul %109, %111, %cst_83 {dimension_numbers = #tpu.dot_dimension_numbers<[1], [0], [0], [1], [0, 0, 1, 1], [], []>} : vector<8x4xbf16>, vector<4x4xbf16>, vector<8x4xf32> -> vector<8x4xf32>
      %113 = arith.addf %108, %112 : vector<8x4xf32>
      %114 = vector.extract_strided_slice %78 {offsets = [0, 0], sizes = [9, 4], strides = [1, 1]} : vector<9x8xbf16> to vector<9x4xbf16>
      %115 = vector.extract_strided_slice %78 {offsets = [0, 4], sizes = [9, 4], strides = [1, 1]} : vector<9x8xbf16> to vector<9x4xbf16>
      %116 = vector.extract_strided_slice %114 {offsets = [0, 0], sizes = [8, 4], strides = [1, 1]} : vector<9x4xbf16> to vector<8x4xbf16>
      %c6_84 = arith.constant 6 : index
      %c0_85 = arith.constant 0 : index
      %c0_86 = arith.constant 0 : index
      %117 = vector.load %arg4[%c6_84, %c0_85, %c0_86] : memref<9x4x4xbf16, #tpu.memory_space<vmem>>, vector<1x4x4xbf16>
      %118 = vector.shape_cast %117 : vector<1x4x4xbf16> to vector<4x4xbf16>
      %cst_87 = arith.constant dense<0.000000e+00> : vector<8x4xf32>
      %119 = tpu.matmul %116, %118, %cst_87 {dimension_numbers = #tpu.dot_dimension_numbers<[1], [0], [0], [1], [0, 0, 1, 1], [], []>} : vector<8x4xbf16>, vector<4x4xbf16>, vector<8x4xf32> -> vector<8x4xf32>
      %120 = arith.addf %113, %119 : vector<8x4xf32>
      %121 = vector.extract_strided_slice %115 {offsets = [0, 0], sizes = [8, 4], strides = [1, 1]} : vector<9x4xbf16> to vector<8x4xbf16>
      %c7_88 = arith.constant 7 : index
      %c0_89 = arith.constant 0 : index
      %c0_90 = arith.constant 0 : index
      %122 = vector.load %arg4[%c7_88, %c0_89, %c0_90] : memref<9x4x4xbf16, #tpu.memory_space<vmem>>, vector<1x4x4xbf16>
      %123 = vector.shape_cast %122 : vector<1x4x4xbf16> to vector<4x4xbf16>
      %cst_91 = arith.constant dense<0.000000e+00> : vector<8x4xf32>
      %124 = tpu.matmul %121, %123, %cst_91 {dimension_numbers = #tpu.dot_dimension_numbers<[1], [0], [0], [1], [0, 0, 1, 1], [], []>} : vector<8x4xbf16>, vector<4x4xbf16>, vector<8x4xf32> -> vector<8x4xf32>
      %125 = arith.addf %120, %124 : vector<8x4xf32>
      %126 = vector.extract_strided_slice %114 {offsets = [1, 0], sizes = [8, 4], strides = [1, 1]} : vector<9x4xbf16> to vector<8x4xbf16>
      %c8_92 = arith.constant 8 : index
      %c0_93 = arith.constant 0 : index
      %c0_94 = arith.constant 0 : index
      %127 = vector.load %arg4[%c8_92, %c0_93, %c0_94] : memref<9x4x4xbf16, #tpu.memory_space<vmem>>, vector<1x4x4xbf16>
      %128 = vector.shape_cast %127 : vector<1x4x4xbf16> to vector<4x4xbf16>
      %cst_95 = arith.constant dense<0.000000e+00> : vector<8x4xf32>
      %129 = tpu.matmul %126, %128, %cst_95 {dimension_numbers = #tpu.dot_dimension_numbers<[1], [0], [0], [1], [0, 0, 1, 1], [], []>} : vector<8x4xbf16>, vector<4x4xbf16>, vector<8x4xf32> -> vector<8x4xf32>
      %130 = arith.addf %125, %129 : vector<8x4xf32>
      %131 = vector.broadcast %0 : vector<1x4xf32> to vector<8x4xf32>
      %132 = arith.addf %130, %131 : vector<8x4xf32>
      %c0_96 = arith.constant 0 : index
      %133 = arith.index_cast %arg7 : i32 to index
      %c0_97 = arith.constant 0 : index
      %c0_98 = arith.constant 0 : index
      %134 = vector.load %arg6[%c0_96, %133, %c0_97, %c0_98] : memref<1x4x8x4xf32, #tpu.memory_space<vmem>>, vector<1x1x8x4xf32>
      %135 = vector.shape_cast %134 : vector<1x1x8x4xf32> to vector<8x4xf32>
      %136 = vector.shape_cast %132 : vector<8x4xf32> to vector<1x1x8x4xf32>
      tpu.vector_store %arg6[%c0_96, %133, %c0_97, %c0_98], %136 {strides = array<i32>} : memref<1x4x8x4xf32, #tpu.memory_space<vmem>>, vector<1x1x8x4xf32>,
    }
    %c3_i32_1 = arith.constant 3 : i32
    %c0_2 = arith.constant 0 : index
    %c6 = arith.constant 6 : index
    %c0_3 = arith.constant 0 : index
    %c0_4 = arith.constant 0 : index
    %2 = vector.load %arg2[%c0_2, %c6, %c0_3, %c0_4] : memref<1x8x9x8xbf16, #tpu.memory_space<vmem>>, vector<1x1x9x8xbf16>
    %3 = vector.shape_cast %2 : vector<1x1x9x8xbf16> to vector<9x8xbf16>
    %c0_5 = arith.constant 0 : index
    %c7 = arith.constant 7 : index
    %c0_6 = arith.constant 0 : index
    %c0_7 = arith.constant 0 : index
    %4 = vector.load %arg2[%c0_5, %c7, %c0_6, %c0_7] : memref<1x8x9x8xbf16, #tpu.memory_space<vmem>>, vector<1x1x9x8xbf16>
    %5 = vector.shape_cast %4 : vector<1x1x9x8xbf16> to vector<9x8xbf16>
    %c0_8 = arith.constant 0 : index
    %c0_9 = arith.constant 0 : index
    %c0_10 = arith.constant 0 : index
    %c0_11 = arith.constant 0 : index
    %6 = vector.load %arg3[%c0_8, %c0_9, %c0_10, %c0_11] : memref<1x1x9x8xbf16, #tpu.memory_space<vmem>>, vector<1x1x9x8xbf16>
    %7 = vector.shape_cast %6 : vector<1x1x9x8xbf16> to vector<9x8xbf16>
    %cst = arith.constant 0.000000e+00 : f32
    %8 = vector.broadcast %cst : f32 to vector<8x4xf32>
    %9 = vector.extract_strided_slice %3 {offsets = [0, 0], sizes = [9, 4], strides = [1, 1]} : vector<9x8xbf16> to vector<9x4xbf16>
    %10 = vector.extract_strided_slice %3 {offsets = [0, 4], sizes = [9, 4], strides = [1, 1]} : vector<9x8xbf16> to vector<9x4xbf16>
    %11 = vector.extract_strided_slice %9 {offsets = [0, 0], sizes = [8, 4], strides = [1, 1]} : vector<9x4xbf16> to vector<8x4xbf16>
    %c0_12 = arith.constant 0 : index
    %c0_13 = arith.constant 0 : index
    %c0_14 = arith.constant 0 : index
    %12 = vector.load %arg4[%c0_12, %c0_13, %c0_14] : memref<9x4x4xbf16, #tpu.memory_space<vmem>>, vector<1x4x4xbf16>
    %13 = vector.shape_cast %12 : vector<1x4x4xbf16> to vector<4x4xbf16>
    %cst_15 = arith.constant dense<0.000000e+00> : vector<8x4xf32>
    %14 = tpu.matmul %11, %13, %cst_15 {dimension_numbers = #tpu.dot_dimension_numbers<[1], [0], [0], [1], [0, 0, 1, 1], [], []>} : vector<8x4xbf16>, vector<4x4xbf16>, vector<8x4xf32> -> vector<8x4xf32>
    %15 = arith.addf %8, %14 : vector<8x4xf32>
    %16 = vector.extract_strided_slice %10 {offsets = [0, 0], sizes = [8, 4], strides = [1, 1]} : vector<9x4xbf16> to vector<8x4xbf16>
    %c1 = arith.constant 1 : index
    %c0_16 = arith.constant 0 : index
    %c0_17 = arith.constant 0 : index
    %17 = vector.load %arg4[%c1, %c0_16, %c0_17] : memref<9x4x4xbf16, #tpu.memory_space<vmem>>, vector<1x4x4xbf16>
    %18 = vector.shape_cast %17 : vector<1x4x4xbf16> to vector<4x4xbf16>
    %cst_18 = arith.constant dense<0.000000e+00> : vector<8x4xf32>
    %19 = tpu.matmul %16, %18, %cst_18 {dimension_numbers = #tpu.dot_dimension_numbers<[1], [0], [0], [1], [0, 0, 1, 1], [], []>} : vector<8x4xbf16>, vector<4x4xbf16>, vector<8x4xf32> -> vector<8x4xf32>
    %20 = arith.addf %15, %19 : vector<8x4xf32>
    %21 = vector.extract_strided_slice %9 {offsets = [1, 0], sizes = [8, 4], strides = [1, 1]} : vector<9x4xbf16> to vector<8x4xbf16>
    %c2 = arith.constant 2 : index
    %c0_19 = arith.constant 0 : index
    %c0_20 = arith.constant 0 : index
    %22 = vector.load %arg4[%c2, %c0_19, %c0_20] : memref<9x4x4xbf16, #tpu.memory_space<vmem>>, vector<1x4x4xbf16>
    %23 = vector.shape_cast %22 : vector<1x4x4xbf16> to vector<4x4xbf16>
    %cst_21 = arith.constant dense<0.000000e+00> : vector<8x4xf32>
    %24 = tpu.matmul %21, %23, %cst_21 {dimension_numbers = #tpu.dot_dimension_numbers<[1], [0], [0], [1], [0, 0, 1, 1], [], []>} : vector<8x4xbf16>, vector<4x4xbf16>, vector<8x4xf32> -> vector<8x4xf32>
    %25 = arith.addf %20, %24 : vector<8x4xf32>
    %26 = vector.extract_strided_slice %5 {offsets = [0, 0], sizes = [9, 4], strides = [1, 1]} : vector<9x8xbf16> to vector<9x4xbf16>
    %27 = vector.extract_strided_slice %5 {offsets = [0, 4], sizes = [9, 4], strides = [1, 1]} : vector<9x8xbf16> to vector<9x4xbf16>
    %28 = vector.extract_strided_slice %26 {offsets = [0, 0], sizes = [8, 4], strides = [1, 1]} : vector<9x4xbf16> to vector<8x4xbf16>
    %c3 = arith.constant 3 : index
    %c0_22 = arith.constant 0 : index
    %c0_23 = arith.constant 0 : index
    %29 = vector.load %arg4[%c3, %c0_22, %c0_23] : memref<9x4x4xbf16, #tpu.memory_space<vmem>>, vector<1x4x4xbf16>
    %30 = vector.shape_cast %29 : vector<1x4x4xbf16> to vector<4x4xbf16>
    %cst_24 = arith.constant dense<0.000000e+00> : vector<8x4xf32>
    %31 = tpu.matmul %28, %30, %cst_24 {dimension_numbers = #tpu.dot_dimension_numbers<[1], [0], [0], [1], [0, 0, 1, 1], [], []>} : vector<8x4xbf16>, vector<4x4xbf16>, vector<8x4xf32> -> vector<8x4xf32>
    %32 = arith.addf %25, %31 : vector<8x4xf32>
    %33 = vector.extract_strided_slice %27 {offsets = [0, 0], sizes = [8, 4], strides = [1, 1]} : vector<9x4xbf16> to vector<8x4xbf16>
    %c4 = arith.constant 4 : index
    %c0_25 = arith.constant 0 : index
    %c0_26 = arith.constant 0 : index
    %34 = vector.load %arg4[%c4, %c0_25, %c0_26] : memref<9x4x4xbf16, #tpu.memory_space<vmem>>, vector<1x4x4xbf16>
    %35 = vector.shape_cast %34 : vector<1x4x4xbf16> to vector<4x4xbf16>
    %cst_27 = arith.constant dense<0.000000e+00> : vector<8x4xf32>
    %36 = tpu.matmul %33, %35, %cst_27 {dimension_numbers = #tpu.dot_dimension_numbers<[1], [0], [0], [1], [0, 0, 1, 1], [], []>} : vector<8x4xbf16>, vector<4x4xbf16>, vector<8x4xf32> -> vector<8x4xf32>
    %37 = arith.addf %32, %36 : vector<8x4xf32>
    %38 = vector.extract_strided_slice %26 {offsets = [1, 0], sizes = [8, 4], strides = [1, 1]} : vector<9x4xbf16> to vector<8x4xbf16>
    %c5 = arith.constant 5 : index
    %c0_28 = arith.constant 0 : index
    %c0_29 = arith.constant 0 : index
    %39 = vector.load %arg4[%c5, %c0_28, %c0_29] : memref<9x4x4xbf16, #tpu.memory_space<vmem>>, vector<1x4x4xbf16>
    %40 = vector.shape_cast %39 : vector<1x4x4xbf16> to vector<4x4xbf16>
    %cst_30 = arith.constant dense<0.000000e+00> : vector<8x4xf32>
    %41 = tpu.matmul %38, %40, %cst_30 {dimension_numbers = #tpu.dot_dimension_numbers<[1], [0], [0], [1], [0, 0, 1, 1], [], []>} : vector<8x4xbf16>, vector<4x4xbf16>, vector<8x4xf32> -> vector<8x4xf32>
    %42 = arith.addf %37, %41 : vector<8x4xf32>
    %43 = vector.extract_strided_slice %7 {offsets = [0, 0], sizes = [9, 4], strides = [1, 1]} : vector<9x8xbf16> to vector<9x4xbf16>
    %44 = vector.extract_strided_slice %7 {offsets = [0, 4], sizes = [9, 4], strides = [1, 1]} : vector<9x8xbf16> to vector<9x4xbf16>
    %45 = vector.extract_strided_slice %43 {offsets = [0, 0], sizes = [8, 4], strides = [1, 1]} : vector<9x4xbf16> to vector<8x4xbf16>
    %c6_31 = arith.constant 6 : index
    %c0_32 = arith.constant 0 : index
    %c0_33 = arith.constant 0 : index
    %46 = vector.load %arg4[%c6_31, %c0_32, %c0_33] : memref<9x4x4xbf16, #tpu.memory_space<vmem>>, vector<1x4x4xbf16>
    %47 = vector.shape_cast %46 : vector<1x4x4xbf16> to vector<4x4xbf16>
    %cst_34 = arith.constant dense<0.000000e+00> : vector<8x4xf32>
    %48 = tpu.matmul %45, %47, %cst_34 {dimension_numbers = #tpu.dot_dimension_numbers<[1], [0], [0], [1], [0, 0, 1, 1], [], []>} : vector<8x4xbf16>, vector<4x4xbf16>, vector<8x4xf32> -> vector<8x4xf32>
    %49 = arith.addf %42, %48 : vector<8x4xf32>
    %50 = vector.extract_strided_slice %44 {offsets = [0, 0], sizes = [8, 4], strides = [1, 1]} : vector<9x4xbf16> to vector<8x4xbf16>
    %c7_35 = arith.constant 7 : index
    %c0_36 = arith.constant 0 : index
    %c0_37 = arith.constant 0 : index
    %51 = vector.load %arg4[%c7_35, %c0_36, %c0_37] : memref<9x4x4xbf16, #tpu.memory_space<vmem>>, vector<1x4x4xbf16>
    %52 = vector.shape_cast %51 : vector<1x4x4xbf16> to vector<4x4xbf16>
    %cst_38 = arith.constant dense<0.000000e+00> : vector<8x4xf32>
    %53 = tpu.matmul %50, %52, %cst_38 {dimension_numbers = #tpu.dot_dimension_numbers<[1], [0], [0], [1], [0, 0, 1, 1], [], []>} : vector<8x4xbf16>, vector<4x4xbf16>, vector<8x4xf32> -> vector<8x4xf32>
    %54 = arith.addf %49, %53 : vector<8x4xf32>
    %55 = vector.extract_strided_slice %43 {offsets = [1, 0], sizes = [8, 4], strides = [1, 1]} : vector<9x4xbf16> to vector<8x4xbf16>
    %c8 = arith.constant 8 : index
    %c0_39 = arith.constant 0 : index
    %c0_40 = arith.constant 0 : index
    %56 = vector.load %arg4[%c8, %c0_39, %c0_40] : memref<9x4x4xbf16, #tpu.memory_space<vmem>>, vector<1x4x4xbf16>
    %57 = vector.shape_cast %56 : vector<1x4x4xbf16> to vector<4x4xbf16>
    %cst_41 = arith.constant dense<0.000000e+00> : vector<8x4xf32>
    %58 = tpu.matmul %55, %57, %cst_41 {dimension_numbers = #tpu.dot_dimension_numbers<[1], [0], [0], [1], [0, 0, 1, 1], [], []>} : vector<8x4xbf16>, vector<4x4xbf16>, vector<8x4xf32> -> vector<8x4xf32>
    %59 = arith.addf %54, %58 : vector<8x4xf32>
    %60 = vector.broadcast %0 : vector<1x4xf32> to vector<8x4xf32>
    %61 = arith.addf %59, %60 : vector<8x4xf32>
    %c0_42 = arith.constant 0 : index
    %c3_43 = arith.constant 3 : index
    %c0_44 = arith.constant 0 : index
    %c0_45 = arith.constant 0 : index
    %62 = vector.load %arg6[%c0_42, %c3_43, %c0_44, %c0_45] : memref<1x4x8x4xf32, #tpu.memory_space<vmem>>, vector<1x1x8x4xf32>
    %63 = vector.shape_cast %62 : vector<1x1x8x4xf32> to vector<8x4xf32>
    %64 = vector.shape_cast %61 : vector<8x4xf32> to vector<1x1x8x4xf32>
    tpu.vector_store %arg6[%c0_42, %c3_43, %c0_44, %c0_45], %64 {strides = array<i32>} : memref<1x4x8x4xf32, #tpu.memory_space<vmem>>, vector<1x1x8x4xf32>,
    return
  }
  func.func @transform_0(%arg0: i32, %arg1: i32) -> (i32, i32, i32, i32) {
    %c0_i32 = arith.constant 0 : i32
    %c0_i32_0 = arith.constant 0 : i32
    %c0_i32_1 = arith.constant 0 : i32
    return %arg0, %arg1, %c0_i32, %c0_i32_0 : i32, i32, i32, i32
  }
  func.func @transform_1(%arg0: i32, %arg1: i32) -> (i32, i32, i32, i32) {
    %c1_i32 = arith.constant 1 : i32
    %0 = arith.addi %arg1, %c1_i32 : i32
    %c8_i32 = arith.constant 8 : i32
    %1 = arith.muli %0, %c8_i32 : i32
    %c0_i32 = arith.constant 0 : i32
    %c0_i32_0 = arith.constant 0 : i32
    %c0_i32_1 = arith.constant 0 : i32
    return %arg0, %1, %c0_i32, %c0_i32_0 : i32, i32, i32, i32
  }
  func.func @transform_2(%arg0: i32, %arg1: i32) -> (i32, i32, i32) {
    %c0_i32 = arith.constant 0 : i32
    %c0_i32_0 = arith.constant 0 : i32
    %c0_i32_1 = arith.constant 0 : i32
    %c0_i32_2 = arith.constant 0 : i32
    return %c0_i32, %c0_i32_0, %c0_i32_1 : i32, i32, i32
  }
  func.func @transform_3(%arg0: i32, %arg1: i32) -> (i32, i32) {
    %c0_i32 = arith.constant 0 : i32
    %c0_i32_0 = arith.constant 0 : i32
    %c0_i32_1 = arith.constant 0 : i32
    return %c0_i32, %c0_i32_0 : i32, i32
  }
  func.func @transform_4(%arg0: i32, %arg1: i32) -> (i32, i32, i32, i32) {
    %c0_i32 = arith.constant 0 : i32
    %c0_i32_0 = arith.constant 0 : i32
    %c0_i32_1 = arith.constant 0 : i32
    return %arg0, %arg1, %c0_i32, %c0_i32_0 : i32, i32, i32, i32
  }
}

</mosaic_0001>

<llo_original>
// kernel: tpu_custom_call.1
$region0: #{tpu_custom_call.1}
  #allocation0 [shape = 'u32[]', space=smem, size = 0x4, offset = 0x4, fixed_abs, tag = 'smem constant byte address 0x4 - core index']
  #allocation1 [shape = 'u32[144,128]{1,0:T(1,128)}', space=vmem, size = 0x12000, scoped, tag = 'internal scratch']
  %s0 = inlined_call_operand.vmem [shape: bf16[2,17,9,8], index: 0, kind: input, shape index: {}]
  %s1 = inlined_call_operand.vmem [shape: bf16[2,17,9,8], index: 1, kind: input, shape index: {}]
  %s2 = inlined_call_operand.vmem [shape: bf16[9,4,4], index: 2, kind: input, shape index: {}]
  %s3 = inlined_call_operand.vmem [shape: f32[1,4], index: 3, kind: input, shape index: {}]
  %s4 = inlined_call_operand.vmem [shape: f32[2,8,8,4], index: 4, kind: output, shape index: {}]
  %s5 = sld [smem:[#allocation0]]
  $region56: #{tpu_custom_call.1} parent=0
    _
  %s7 = ssub.s32 1, %s5
  %s8 = scalar_select 0, %s7, %s5
  loop: start=0, step=1, limit=6
  $region2: #{tpu_custom_call.1} parent=0 // loop_pre_header
    _
  $region3: #{tpu_custom_call.1} parent=0 // loop_header
    %s10 = sphi 0, %s14
    %p11 = scmp.ge.s32.totalorder %s10, 6
    %s17 = sphi 0, %s29
    %s18 = sphi 0, %s25
    %s19 = sphi 0, %s17
    %s20 = sphi 0, %s18
    %s21 = sphi 0, %s19
    %s22 = sphi 0, %s20
    %s34 = sphi 0, %s36
    %s37 = sphi 0, %s34
    %s38 = sphi 0, %s37
    %s54 = sphi 0, %s38
    %s66 = sphi 0, %s68
    %s69 = sphi 0, %s66
    %s70 = sphi 0, %s69
    %s86 = sphi 0, %s70
    %s90 = sphi 0, %s90
    %s92 = sphi 0, %s90
    %s93 = sphi 0, %s92
    %s107 = sphi 0, %s93
    %s111 = sphi 0, %s111
    %s113 = sphi 0, %s111
    %s114 = sphi 0, %s113
    %s128 = sphi 0, %s114
    %s136 = sphi 0, %s138
    %s139 = sphi 0, %s136
    %s140 = sphi 0, %s139
    %s156 = sphi 0, %s140
  $region4: #{tpu_custom_call.1} parent=0 // loop_header_branch
    %13 = sbr.rel (%p11) target = $region8
  $region5: #{tpu_custom_call.1} parent=0 // loop_body
    %s15 = ssub.s32 %s10, 1
    %s16 = ssub.s32 %s10, 2
    %s23 = sadd.s32 1, %s18
    %p24 = scmp.ge.s32.totalorder %s23, 2
    %s25 = scalar_select %p24, 0, %s23
    %s26 = sadd.s32 1, %s17
    %s27 = scalar_select %p24, %s26, %s17
    %p28 = scmp.ge.s32.totalorder %s27, 2
    %s29 = scalar_select %p28, 0, %s27
    %s30 = ssub.s32 %s17, %s29
    %s31 = ssub.s32 %s18, %s25
    %s32 = sor.u32 %s30, %s31
    %p33 = scmp.eq.s32.totalorder %s32, 0
    %s35 = sadd.s32 %s34, 1
    %s36 = scalar_select %p33, %s34, %s35
    %p39 = pneg %p33
    %p40 = scmp.eq.s32.totalorder %s10, 3
    %p41 = por %p39, %p40
    %p42 = scmp.ne.s32.totalorder %s34, %s37
    %p43 = scmp.eq.s32.totalorder %s10, 0
    %p44 = por %p42, %p43
    %p45 = scmp.ne.s32.totalorder %s34, %s37
    %p46 = scmp.eq.s32.totalorder %s15, 3
    %p47 = por %p45, %p46
    %p48 = scmp.ne.s32.totalorder %s37, %s38
    %p49 = scmp.eq.s32.totalorder %s15, 0
    %p50 = por %p48, %p49
    %p51 = scmp.ne.s32.totalorder %s37, %s38
    %p52 = scmp.eq.s32.totalorder %s16, 3
    %p53 = por %p51, %p52
    %p55 = scmp.ne.s32.totalorder %s38, %s54
    %p56 = scmp.eq.s32.totalorder %s16, 0
    %p57 = por %p55, %p56
    %s58 = sadd.s32 %s18, 1
    %s59 = smul.u32 %s58, 8
    %s60 = sadd.s32 %s25, 1
    %s61 = smul.u32 %s60, 8
    %s62 = ssub.s32 %s17, %s29
    %s63 = ssub.s32 %s59, %s61
    %s64 = sor.u32 %s62, %s63
    %p65 = scmp.eq.s32.totalorder %s64, 0
    %s67 = sadd.s32 %s66, 1
    %s68 = scalar_select %p65, %s66, %s67
    %p71 = pneg %p65
    %p72 = scmp.eq.s32.totalorder %s10, 3
    %p73 = por %p71, %p72
    %p74 = scmp.ne.s32.totalorder %s66, %s69
    %p75 = scmp.eq.s32.totalorder %s10, 0
    %p76 = por %p74, %p75
    %p77 = scmp.ne.s32.totalorder %s66, %s69
    %p78 = scmp.eq.s32.totalorder %s15, 3
    %p79 = por %p77, %p78
    %p80 = scmp.ne.s32.totalorder %s69, %s70
    %p81 = scmp.eq.s32.totalorder %s15, 0
    %p82 = por %p80, %p81
    %p83 = scmp.ne.s32.totalorder %s69, %s70
    %p84 = scmp.eq.s32.totalorder %s16, 3
    %p85 = por %p83, %p84
    %p87 = scmp.ne.s32.totalorder %s70, %s86
    %p88 = scmp.eq.s32.totalorder %s16, 0
    %p89 = por %p87, %p88
    %s91 = sadd.s32 %s90, 1
    %p94 = scmp.eq.s32.totalorder %s10, 3
    %p95 = scmp.ne.s32.totalorder %s90, %s92
    %p96 = scmp.eq.s32.totalorder %s10, 0
    %p97 = por %p95, %p96
    %p98 = scmp.ne.s32.totalorder %s90, %s92
    %p99 = scmp.eq.s32.totalorder %s15, 3
    %p100 = por %p98, %p99
    %p101 = scmp.ne.s32.totalorder %s92, %s93
    %p102 = scmp.eq.s32.totalorder %s15, 0
    %p103 = por %p101, %p102
    %p104 = scmp.ne.s32.totalorder %s92, %s93
    %p105 = scmp.eq.s32.totalorder %s16, 3
    %p106 = por %p104, %p105
    %p108 = scmp.ne.s32.totalorder %s93, %s107
    %p109 = scmp.eq.s32.totalorder %s16, 0
    %p110 = por %p108, %p109
    %s112 = sadd.s32 %s111, 1
    %p115 = scmp.eq.s32.totalorder %s10, 3
    %p116 = scmp.ne.s32.totalorder %s111, %s113
    %p117 = scmp.eq.s32.totalorder %s10, 0
    %p118 = por %p116, %p117
    %p119 = scmp.ne.s32.totalorder %s111, %s113
    %p120 = scmp.eq.s32.totalorder %s15, 3
    %p121 = por %p119, %p120
    %p122 = scmp.ne.s32.totalorder %s113, %s114
    %p123 = scmp.eq.s32.totalorder %s15, 0
    %p124 = por %p122, %p123
    %p125 = scmp.ne.s32.totalorder %s113, %s114
    %p126 = scmp.eq.s32.totalorder %s16, 3
    %p127 = por %p125, %p126
    %p129 = scmp.ne.s32.totalorder %s114, %s128
    %p130 = scmp.eq.s32.totalorder %s16, 0
    %p131 = por %p129, %p130
    %s132 = ssub.s32 %s17, %s29
    %s133 = ssub.s32 %s18, %s25
    %s134 = sor.u32 %s132, %s133
    %p135 = scmp.eq.s32.totalorder %s134, 0
    %s137 = sadd.s32 %s136, 1
    %s138 = scalar_select %p135, %s136, %s137
    %p141 = pneg %p135
    %p142 = scmp.eq.s32.totalorder %s10, 3
    %p143 = por %p141, %p142
    %p144 = scmp.ne.s32.totalorder %s136, %s139
    %p145 = scmp.eq.s32.totalorder %s10, 0
    %p146 = por %p144, %p145
    %p147 = scmp.ne.s32.totalorder %s136, %s139
    %p148 = scmp.eq.s32.totalorder %s15, 3
    %p149 = por %p147, %p148
    %p150 = scmp.ne.s32.totalorder %s139, %s140
    %p151 = scmp.eq.s32.totalorder %s15, 0
    %p152 = por %p150, %p151
    %p153 = scmp.ne.s32.totalorder %s139, %s140
    %p154 = scmp.eq.s32.totalorder %s16, 3
    %p155 = por %p153, %p154
    %p157 = scmp.ne.s32.totalorder %s140, %s156
    %p158 = scmp.eq.s32.totalorder %s16, 0
    %p159 = por %p157, %p158
    %p160 = scmp.le.s32.totalorder 1, %s10
    %p161 = scmp.lt.s32.totalorder %s10, 5
    %p162 = pnand %p160, %p161
    %p163 = pneg %p162
    // Predicated region
    $region9: #{tpu_custom_call.1} parent=5 // pred_check
      _
    $region10: #{tpu_custom_call.1} parent=5 // pred_check_branch
      %165 = sbr.rel (%p162) target = $region12
    $region11: #{tpu_custom_call.1} parent=5 // pred_region
      %s166 = ssub.s32 %s10, 1
      // Predicated region
      $region13: #{tpu_custom_call.1} parent=11 // pred_check
        %p167 = pneg %p103
      $region14: #{tpu_custom_call.1} parent=11 // pred_check_branch
        %169 = sbr.rel (%p167) target = $region16
      $region15: #{tpu_custom_call.1} parent=11 // pred_region
        _
      $region16: #{tpu_custom_call.1} parent=11 // pred_fallthru
        _
      // Predicated region
      $region17: #{tpu_custom_call.1} parent=11 // pred_check
        %p170 = pneg %p124
      $region18: #{tpu_custom_call.1} parent=11 // pred_check_branch
        %172 = sbr.rel (%p170) target = $region20
      $region19: #{tpu_custom_call.1} parent=11 // pred_region
        _
      $region20: #{tpu_custom_call.1} parent=11 // pred_fallthru
        _
    $region12: #{tpu_custom_call.1} parent=5 // pred_fallthru
      _
    %p173 = scmp.lt.s32.totalorder %s10, 4
    // Predicated region
    $region21: #{tpu_custom_call.1} parent=5 // pred_check
      %p174 = pneg %p173
    $region22: #{tpu_custom_call.1} parent=5 // pred_check_branch
      %176 = sbr.rel (%p174) target = $region24
    $region23: #{tpu_custom_call.1} parent=5 // pred_region
      // Predicated region
      $region25: #{tpu_custom_call.1} parent=23 // pred_check
        %p177 = pneg %p44
      $region26: #{tpu_custom_call.1} parent=23 // pred_check_branch
        %179 = sbr.rel (%p177) target = $region28
      $region27: #{tpu_custom_call.1} parent=23 // pred_region
        %s180 = smul.u32 8, %s18
        %s181 = ssub.s32 17, %s180
        %p182 = scmp.lt.s32.totalorder %s181, 8
        %s183 = scalar_select %p182, %s181, 8
        %s184 = smul.u32 64, %s183
        %s185 = smul.u32 %s184, 2
        %p186 = scmp.lt.s32.totalorder %s17, 1
        %s187 = scalar_select %p186, %s17, 1
        %p188 = scmp.lt.s32.totalorder %s180, 16
        %s189 = scalar_select %p188, %s180, 16
        %s190 = smul.addr %s189, 2
        %s191 = smul.addr %s187, 34
        %s192 = sadd.s32 %s190, %s191
        %s193 = smul.addr %s192, 4
        %s194 = scalar_lea.vmem %s0, %s193
        %s195 = smul.u32 8, %s18
        %s196 = ssub.s32 17, %s195
        %p197 = scmp.lt.s32.totalorder %s196, 8
        %s198 = scalar_select %p197, %s196, 8
        %s199 = smul.u32 64, %s198
        %s200 = smul.u32 %s199, 2
      $region28: #{tpu_custom_call.1} parent=23 // pred_fallthru
        _
      // Predicated region
      $region29: #{tpu_custom_call.1} parent=23 // pred_check
        %p201 = pneg %p76
      $region30: #{tpu_custom_call.1} parent=23 // pred_check_branch
        %203 = sbr.rel (%p201) target = $region32
      $region31: #{tpu_custom_call.1} parent=23 // pred_region
        %s204 = sadd.s32 %s18, 1
        %s205 = smul.u32 %s204, 8
        %p206 = scmp.lt.s32.totalorder %s17, 1
        %s207 = scalar_select %p206, %s17, 1
        %p208 = scmp.lt.s32.totalorder %s205, 16
        %s209 = scalar_select %p208, %s205, 16
        %s210 = smul.addr %s209, 2
        %s211 = smul.addr %s207, 34
        %s212 = sadd.s32 %s210, %s211
        %s213 = smul.addr %s212, 4
        %s214 = scalar_lea.vmem %s1, %s213
        %s215 = sadd.s32 %s18, 1
        %s216 = smul.u32 %s215, 8
      $region32: #{tpu_custom_call.1} parent=23 // pred_fallthru
        _
    $region24: #{tpu_custom_call.1} parent=5 // pred_fallthru
      _
    %p217 = scmp.le.s32.totalorder 1, %s10
    %p218 = scmp.lt.s32.totalorder %s10, 5
    %p219 = pnand %p217, %p218
    %p220 = pneg %p219
    // Predicated region
    $region33: #{tpu_custom_call.1} parent=5 // pred_check
      _
    $region34: #{tpu_custom_call.1} parent=5 // pred_check_branch
      %222 = sbr.rel (%p219) target = $region36
    $region35: #{tpu_custom_call.1} parent=5 // pred_region
      %s223 = ssub.s32 %s10, 1
      %s224 = smul.u32 8, %s20
      %s225 = ssub.s32 17, %s224
      %p226 = scmp.lt.s32.totalorder %s225, 8
      %s227 = scalar_select %p226, %s225, 8
      %s228 = smul.u32 64, %s227
      %s229 = smul.u32 %s228, 2
      %p230 = scmp.lt.s32.totalorder %s19, 1
      %s231 = scalar_select %p230, %s19, 1
      %p232 = scmp.lt.s32.totalorder %s224, 16
      %s233 = scalar_select %p232, %s224, 16
      %s234 = smul.addr %s233, 2
      %s235 = smul.addr %s231, 34
      %s236 = sadd.s32 %s234, %s235
      %s237 = smul.addr %s236, 4
      %s238 = scalar_lea.vmem %s0, %s237
      %p239 = pneg %p50
      %p240 = pneg %p47
      %s241 = sadd.s32 %s20, 1
      %s242 = smul.u32 %s241, 8
      %p243 = scmp.lt.s32.totalorder %s19, 1
      %s244 = scalar_select %p243, %s19, 1
      %p245 = scmp.lt.s32.totalorder %s242, 16
      %s246 = scalar_select %p245, %s242, 16
      %s247 = smul.addr %s246, 2
      %s248 = smul.addr %s244, 34
      %s249 = sadd.s32 %s247, %s248
      %s250 = smul.addr %s249, 4
      %s251 = scalar_lea.vmem %s1, %s250
      %p252 = pneg %p82
      %p253 = pneg %p79
      %p254 = pneg %p103
      %p255 = pneg %p100
      %p256 = pneg %p124
      %p257 = pneg %p121
      %p258 = pneg %p152
      %p259 = pneg %p149
      %s260 = smul.u32 4, %s20
      %p261 = scmp.lt.s32.totalorder %s19, 1
      %s262 = scalar_select %p261, %s19, 1
      %p263 = scmp.lt.s32.totalorder %s260, 7
      %s264 = scalar_select %p263, %s260, 7
      %s265 = smul.addr %s262, 8
      %s266 = sadd.s32 %s264, %s265
      %s267 = smul.addr %s266, 8
      %s268 = scalar_lea.vmem %s4, %s267
      %s269 = smul.u32 8, %s20
      %s270 = ssub.s32 17, %s269
      %p271 = scmp.lt.s32.totalorder %s270, 8
      %s272 = scalar_select %p271, %s270, 8
      %s273 = smul.u32 64, %s272
      %s274 = smul.u32 %s273, 2
      %p275 = scmp.lt.s32.totalorder %s19, 1
      %s276 = scalar_select %p275, %s19, 1
      %p277 = scmp.lt.s32.totalorder %s269, 16
      %s278 = scalar_select %p277, %s269, 16
      %s279 = smul.addr %s278, 2
      %s280 = smul.addr %s276, 34
      %s281 = sadd.s32 %s279, %s280
      %s282 = smul.addr %s281, 4
      %s283 = scalar_lea.vmem %s0, %s282
      %s284 = smul.u32 8, %s20
      %s285 = ssub.s32 17, %s284
      %p286 = scmp.lt.s32.totalorder %s285, 8
      %s287 = scalar_select %p286, %s285, 8
      %s288 = smul.u32 64, %s287
      %s289 = smul.u32 %s288, 2
      %s290 = sadd.s32 %s20, 1
      %s291 = smul.u32 %s290, 8
      %p292 = scmp.lt.s32.totalorder %s19, 1
      %s293 = scalar_select %p292, %s19, 1
      %p294 = scmp.lt.s32.totalorder %s291, 16
      %s295 = scalar_select %p294, %s291, 16
      %s296 = smul.addr %s295, 2
      %s297 = smul.addr %s293, 34
      %s298 = sadd.s32 %s296, %s297
      %s299 = smul.addr %s298, 4
      %s300 = scalar_lea.vmem %s1, %s299
      %s301 = sadd.s32 %s20, 1
      %s302 = smul.u32 %s301, 8
      %s303 = smul.u32 4, %s20
      %p304 = scmp.lt.s32.totalorder %s19, 1
      %s305 = scalar_select %p304, %s19, 1
      %p306 = scmp.lt.s32.totalorder %s303, 7
      %s307 = scalar_select %p306, %s303, 7
      %s308 = smul.addr %s305, 8
      %s309 = sadd.s32 %s307, %s308
      %s310 = smul.addr %s309, 8
      %s311 = scalar_lea.vmem %s4, %s310
      %s312 = smul.u32 4, %s20
      %v314 = vld [vmem:[%s3] sm:$0x1]
      loop: start=0, step=1, limit=3
      $region37: #{tpu_custom_call.1} parent=35 // loop_pre_header
        _
      $region38: #{tpu_custom_call.1} parent=35 // loop_header
        %s316 = sphi 0, %s320
        %p317 = scmp.ge.s32.totalorder %s316, 3
      $region39: #{tpu_custom_call.1} parent=35 // loop_header_branch
        %319 = sbr.rel (%p317) target = $region43
      $region40: #{tpu_custom_call.1} parent=35 // loop_body
        %s321 = smul.u32 %s316, 2
        %s322 = smul.u32 %s321, 2
        %s323 = smul.addr %s322, 4
        %s324 = scalar_lea.vmem %s283, %s323
        %v325 = vld [vmem:[%s324] sm:$0xf]
        %v326 = vld [vmem:[%s324 + $0x4] sm:$0x1]
        %s327 = sadd.s32 %s321, 1
        %s328 = smul.u32 %s327, 2
        %s329 = smul.addr %s328, 4
        %s330 = scalar_lea.vmem %s283, %s329
        %v331 = vld [vmem:[%s330] sm:$0xf]
        %v332 = vld [vmem:[%s330 + $0x4] sm:$0x1]
        %s333 = sadd.s32 %s321, 2
        %s334 = smul.u32 %s333, 2
        %s335 = smul.addr %s334, 4
        %s336 = scalar_lea.vmem %s283, %s335
        %v337 = vld [vmem:[%s336] sm:$0xf]
        %v338 = vld [vmem:[%s336 + $0x4] sm:$0x1]
        %v339 = vld [vmem:[%s2] sm:$0x3]
        %s340 = scalar_lea.vmem %s2, 2
        %v341 = vld [vmem:[%s340] sm:$0x3]
        %v343 = vunpack.c.l.b16 %v325
        %v344 = vpack.c.b16 %v343, %v343
        %345 = vrot.lane.b32.xlu0 %v344, 124
        %v346 = vpop.permute.xlu0 %345
        %vm347 = vcmask 31744
        %v349 = vsel %vm347, %v346, 0
        %vm351 = vcmask 1041408
        %v353 = vsel %vm351, %v341, 0
        %355 = vmatprep.subr.bf16.mxu0 0
        %356 = vmatpush1.bf16.msra.mxu0 0
        %357 = vmatprep.subr.bf16.mxu0 0
        %358 = vmatpush1.bf16.msra.mxu0 0
        %359 = vmatprep.subr.bf16.mxu0 0
        %360 = vmatpush1.bf16.msra.mxu0 0
        %361 = vmatprep.subr.bf16.mxu0 0
        %362 = vmatpush1.bf16.msra.mxu0 0
        %363 = vmatprep.subr.bf16.mxu0 0
        %364 = vmatpush1.bf16.msra.mxu0 0
        %365 = vmatprep.subr.bf16.mxu0 0
        %366 = vmatpush1.bf16.msra.mxu0 0
        %367 = vmatprep.subr.bf16.mxu0 0
        %368 = vmatpush1.bf16.msra.mxu0 0
        %369 = vmatprep.subr.bf16.mxu0 0
        %370 = vmatpush1.bf16.msra.mxu0 %v353
        %371 = vmatprep.subr.bf16.mxu0 0
        %372 = vmatpush2.bf16.msra.mxu0 0
        %373 = vmatprep.subr.bf16.mxu0 0
        %374 = vmatpush2.bf16.msra.mxu0 0
        %375 = vmatprep.subr.bf16.mxu0 0
        %376 = vmatpush2.bf16.msra.mxu0 0
        %377 = vmatprep.subr.bf16.mxu0 0
        %378 = vmatpush2.bf16.msra.mxu0 0
        %379 = vmatprep.subr.bf16.mxu0 0
        %380 = vmatpush2.bf16.msra.mxu0 0
        %381 = vmatprep.subr.bf16.mxu0 0
        %382 = vmatpush2.bf16.msra.mxu0 0
        %383 = vmatprep.subr.bf16.mxu0 0
        %384 = vmatpush2.bf16.msra.mxu0 0
        %385 = vmatprep.subr.bf16.mxu0 0
        %386 = vmatpush2.bf16.msra.mxu0 0
        %387 = vmatprep.mubr.bf16.mxu0 0
        %388 = vmatmul.mubr.bf16.gmra.mxu0 %v349
        %v389 = vpop.f32.mrf.mxu0
        %v390 = vadd.f32 0.0, %v389
        %v391 = vpop.f32.mrf.mxu0
        %v392 = vpop.f32.mrf.mxu0
        %v393 = vpop.f32.mrf.mxu0
        %394 = vdwg.mxu0
        %v396 = vsel %vm347, %v325, 0
        %v399 = vsel %vm351, %v339, 0
        %401 = vmatprep.subr.bf16.mxu0 0
        %402 = vmatpush1.bf16.msra.mxu0 0
        %403 = vmatprep.subr.bf16.mxu0 0
        %404 = vmatpush1.bf16.msra.mxu0 0
        %405 = vmatprep.subr.bf16.mxu0 0
        %406 = vmatpush1.bf16.msra.mxu0 0
        %407 = vmatprep.subr.bf16.mxu0 0
        %408 = vmatpush1.bf16.msra.mxu0 0
        %409 = vmatprep.subr.bf16.mxu0 0
        %410 = vmatpush1.bf16.msra.mxu0 0
        %411 = vmatprep.subr.bf16.mxu0 0
        %412 = vmatpush1.bf16.msra.mxu0 0
        %413 = vmatprep.subr.bf16.mxu0 0
        %414 = vmatpush1.bf16.msra.mxu0 0
        %415 = vmatprep.subr.bf16.mxu0 0
        %416 = vmatpush1.bf16.msra.mxu0 %v399
        %417 = vmatprep.subr.bf16.mxu0 0
        %418 = vmatpush2.bf16.msra.mxu0 0
        %419 = vmatprep.subr.bf16.mxu0 0
        %420 = vmatpush2.bf16.msra.mxu0 0
        %421 = vmatprep.subr.bf16.mxu0 0
        %422 = vmatpush2.bf16.msra.mxu0 0
        %423 = vmatprep.subr.bf16.mxu0 0
        %424 = vmatpush2.bf16.msra.mxu0 0
        %425 = vmatprep.subr.bf16.mxu0 0
        %426 = vmatpush2.bf16.msra.mxu0 0
        %427 = vmatprep.subr.bf16.mxu0 0
        %428 = vmatpush2.bf16.msra.mxu0 0
        %429 = vmatprep.subr.bf16.mxu0 0
        %430 = vmatpush2.bf16.msra.mxu0 0
        %431 = vmatprep.subr.bf16.mxu0 0
        %432 = vmatpush2.bf16.msra.mxu0 0
        %433 = vmatprep.mubr.bf16.mxu0 0
        %434 = vmatmul.mubr.bf16.gmra.mxu0 %v396
        %v435 = vpop.f32.mrf.mxu0
        %v436 = vadd.f32 %v390, %v435
        %v437 = vpop.f32.mrf.mxu0
        %v438 = vpop.f32.mrf.mxu0
        %v439 = vpop.f32.mrf.mxu0
        %440 = vdwg.mxu0
        %s441 = scalar_lea.vmem %s2, 4
        %v442 = vld [vmem:[%s441] sm:$0x3]
        %v444 = vunpack.c.l.b16 %v326
        %v445 = vpack.c.b16 %v444, %v343
        %v447 = vshrl.u32 %v445, 16
        %v449 = vshll.u32 %v445, 16
        %v451 = vrot.slane %v449, 1
        %v452 = vor.u32 %v447, %v451
        %v454 = vsel %vm347, %v452, 0
        %v457 = vsel %vm351, %v442, 0
        %459 = vmatprep.subr.bf16.mxu0 0
        %460 = vmatpush1.bf16.msra.mxu0 0
        %461 = vmatprep.subr.bf16.mxu0 0
        %462 = vmatpush1.bf16.msra.mxu0 0
        %463 = vmatprep.subr.bf16.mxu0 0
        %464 = vmatpush1.bf16.msra.mxu0 0
        %465 = vmatprep.subr.bf16.mxu0 0
        %466 = vmatpush1.bf16.msra.mxu0 0
        %467 = vmatprep.subr.bf16.mxu0 0
        %468 = vmatpush1.bf16.msra.mxu0 0
        %469 = vmatprep.subr.bf16.mxu0 0
        %470 = vmatpush1.bf16.msra.mxu0 0
        %471 = vmatprep.subr.bf16.mxu0 0
        %472 = vmatpush1.bf16.msra.mxu0 0
        %473 = vmatprep.subr.bf16.mxu0 0
        %474 = vmatpush1.bf16.msra.mxu0 %v457
        %475 = vmatprep.subr.bf16.mxu0 0
        %476 = vmatpush2.bf16.msra.mxu0 0
        %477 = vmatprep.subr.bf16.mxu0 0
        %478 = vmatpush2.bf16.msra.mxu0 0
        %479 = vmatprep.subr.bf16.mxu0 0
        %480 = vmatpush2.bf16.msra.mxu0 0
        %481 = vmatprep.subr.bf16.mxu0 0
        %482 = vmatpush2.bf16.msra.mxu0 0
        %483 = vmatprep.subr.bf16.mxu0 0
        %484 = vmatpush2.bf16.msra.mxu0 0
        %485 = vmatprep.subr.bf16.mxu0 0
        %486 = vmatpush2.bf16.msra.mxu0 0
        %487 = vmatprep.subr.bf16.mxu0 0
        %488 = vmatpush2.bf16.msra.mxu0 0
        %489 = vmatprep.subr.bf16.mxu0 0
        %490 = vmatpush2.bf16.msra.mxu0 0
        %491 = vmatprep.mubr.bf16.mxu0 0
        %492 = vmatmul.mubr.bf16.gmra.mxu0 %v454
        %v493 = vpop.f32.mrf.mxu0
        %v494 = vadd.f32 0.0, %v493
        %v495 = vpop.f32.mrf.mxu0
        %v496 = vpop.f32.mrf.mxu0
        %v497 = vpop.f32.mrf.mxu0
        %498 = vdwg.mxu0
        %v499 = vadd.f32 %v436, %v494
        %s500 = scalar_lea.vmem %s2, 6
        %v501 = vld [vmem:[%s500] sm:$0x3]
        %v503 = vsel %vm347, %v331, 0
        %v506 = vsel %vm351, %v501, 0
        %508 = vmatprep.subr.bf16.mxu0 0
        %509 = vmatpush1.bf16.msra.mxu0 0
        %510 = vmatprep.subr.bf16.mxu0 0
        %511 = vmatpush1.bf16.msra.mxu0 0
        %512 = vmatprep.subr.bf16.mxu0 0
        %513 = vmatpush1.bf16.msra.mxu0 0
        %514 = vmatprep.subr.bf16.mxu0 0
        %515 = vmatpush1.bf16.msra.mxu0 0
        %516 = vmatprep.subr.bf16.mxu0 0
        %517 = vmatpush1.bf16.msra.mxu0 0
        %518 = vmatprep.subr.bf16.mxu0 0
        %519 = vmatpush1.bf16.msra.mxu0 0
        %520 = vmatprep.subr.bf16.mxu0 0
        %521 = vmatpush1.bf16.msra.mxu0 0
        %522 = vmatprep.subr.bf16.mxu0 0
        %523 = vmatpush1.bf16.msra.mxu0 %v506
        %524 = vmatprep.subr.bf16.mxu0 0
        %525 = vmatpush2.bf16.msra.mxu0 0
        %526 = vmatprep.subr.bf16.mxu0 0
        %527 = vmatpush2.bf16.msra.mxu0 0
        %528 = vmatprep.subr.bf16.mxu0 0
        %529 = vmatpush2.bf16.msra.mxu0 0
        %530 = vmatprep.subr.bf16.mxu0 0
        %531 = vmatpush2.bf16.msra.mxu0 0
        %532 = vmatprep.subr.bf16.mxu0 0
        %533 = vmatpush2.bf16.msra.mxu0 0
        %534 = vmatprep.subr.bf16.mxu0 0
        %535 = vmatpush2.bf16.msra.mxu0 0
        %536 = vmatprep.subr.bf16.mxu0 0
        %537 = vmatpush2.bf16.msra.mxu0 0
        %538 = vmatprep.subr.bf16.mxu0 0
        %539 = vmatpush2.bf16.msra.mxu0 0
        %540 = vmatprep.mubr.bf16.mxu0 0
        %541 = vmatmul.mubr.bf16.gmra.mxu0 %v503
        %v542 = vpop.f32.mrf.mxu0
        %v543 = vadd.f32 0.0, %v542
        %v544 = vpop.f32.mrf.mxu0
        %v545 = vpop.f32.mrf.mxu0
        %v546 = vpop.f32.mrf.mxu0
        %547 = vdwg.mxu0
        %v548 = vadd.f32 %v499, %v543
        %s549 = scalar_lea.vmem %s2, 8
        %v550 = vld [vmem:[%s549] sm:$0x3]
        %v552 = vunpack.c.l.b16 %v331
        %v553 = vpack.c.b16 %v552, %v552
        %554 = vrot.lane.b32.xlu0 %v553, 124
        %v555 = vpop.permute.xlu0 %554
        %v557 = vsel %vm347, %v555, 0
        %v560 = vsel %vm351, %v550, 0
        %562 = vmatprep.subr.bf16.mxu0 0
        %563 = vmatpush1.bf16.msra.mxu0 0
        %564 = vmatprep.subr.bf16.mxu0 0
        %565 = vmatpush1.bf16.msra.mxu0 0
        %566 = vmatprep.subr.bf16.mxu0 0
        %567 = vmatpush1.bf16.msra.mxu0 0
        %568 = vmatprep.subr.bf16.mxu0 0
        %569 = vmatpush1.bf16.msra.mxu0 0
        %570 = vmatprep.subr.bf16.mxu0 0
        %571 = vmatpush1.bf16.msra.mxu0 0
        %572 = vmatprep.subr.bf16.mxu0 0
        %573 = vmatpush1.bf16.msra.mxu0 0
        %574 = vmatprep.subr.bf16.mxu0 0
        %575 = vmatpush1.bf16.msra.mxu0 0
        %576 = vmatprep.subr.bf16.mxu0 0
        %577 = vmatpush1.bf16.msra.mxu0 %v560
        %578 = vmatprep.subr.bf16.mxu0 0
        %579 = vmatpush2.bf16.msra.mxu0 0
        %580 = vmatprep.subr.bf16.mxu0 0
        %581 = vmatpush2.bf16.msra.mxu0 0
        %582 = vmatprep.subr.bf16.mxu0 0
        %583 = vmatpush2.bf16.msra.mxu0 0
        %584 = vmatprep.subr.bf16.mxu0 0
        %585 = vmatpush2.bf16.msra.mxu0 0
        %586 = vmatprep.subr.bf16.mxu0 0
        %587 = vmatpush2.bf16.msra.mxu0 0
        %588 = vmatprep.subr.bf16.mxu0 0
        %589 = vmatpush2.bf16.msra.mxu0 0
        %590 = vmatprep.subr.bf16.mxu0 0
        %591 = vmatpush2.bf16.msra.mxu0 0
        %592 = vmatprep.subr.bf16.mxu0 0
        %593 = vmatpush2.bf16.msra.mxu0 0
        %594 = vmatprep.mubr.bf16.mxu0 0
        %595 = vmatmul.mubr.bf16.gmra.mxu0 %v557
        %v596 = vpop.f32.mrf.mxu0
        %v597 = vadd.f32 0.0, %v596
        %v598 = vpop.f32.mrf.mxu0
        %v599 = vpop.f32.mrf.mxu0
        %v600 = vpop.f32.mrf.mxu0
        %601 = vdwg.mxu0
        %v602 = vadd.f32 %v548, %v597
        %s603 = scalar_lea.vmem %s2, 10
        %v604 = vld [vmem:[%s603] sm:$0x3]
        %v606 = vunpack.c.l.b16 %v332
        %v607 = vpack.c.b16 %v606, %v552
        %v609 = vshrl.u32 %v607, 16
        %v611 = vshll.u32 %v607, 16
        %v613 = vrot.slane %v611, 1
        %v614 = vor.u32 %v609, %v613
        %v616 = vsel %vm347, %v614, 0
        %v619 = vsel %vm351, %v604, 0
        %621 = vmatprep.subr.bf16.mxu0 0
        %622 = vmatpush1.bf16.msra.mxu0 0
        %623 = vmatprep.subr.bf16.mxu0 0
        %624 = vmatpush1.bf16.msra.mxu0 0
        %625 = vmatprep.subr.bf16.mxu0 0
        %626 = vmatpush1.bf16.msra.mxu0 0
        %627 = vmatprep.subr.bf16.mxu0 0
        %628 = vmatpush1.bf16.msra.mxu0 0
        %629 = vmatprep.subr.bf16.mxu0 0
        %630 = vmatpush1.bf16.msra.mxu0 0
        %631 = vmatprep.subr.bf16.mxu0 0
        %632 = vmatpush1.bf16.msra.mxu0 0
        %633 = vmatprep.subr.bf16.mxu0 0
        %634 = vmatpush1.bf16.msra.mxu0 0
        %635 = vmatprep.subr.bf16.mxu0 0
        %636 = vmatpush1.bf16.msra.mxu0 %v619
        %637 = vmatprep.subr.bf16.mxu0 0
        %638 = vmatpush2.bf16.msra.mxu0 0
        %639 = vmatprep.subr.bf16.mxu0 0
        %640 = vmatpush2.bf16.msra.mxu0 0
        %641 = vmatprep.subr.bf16.mxu0 0
        %642 = vmatpush2.bf16.msra.mxu0 0
        %643 = vmatprep.subr.bf16.mxu0 0
        %644 = vmatpush2.bf16.msra.mxu0 0
        %645 = vmatprep.subr.bf16.mxu0 0
        %646 = vmatpush2.bf16.msra.mxu0 0
        %647 = vmatprep.subr.bf16.mxu0 0
        %648 = vmatpush2.bf16.msra.mxu0 0
        %649 = vmatprep.subr.bf16.mxu0 0
        %650 = vmatpush2.bf16.msra.mxu0 0
        %651 = vmatprep.subr.bf16.mxu0 0
        %652 = vmatpush2.bf16.msra.mxu0 0
        %653 = vmatprep.mubr.bf16.mxu0 0
        %654 = vmatmul.mubr.bf16.gmra.mxu0 %v616
        %v655 = vpop.f32.mrf.mxu0
        %v656 = vadd.f32 0.0, %v655
        %v657 = vpop.f32.mrf.mxu0
        %v658 = vpop.f32.mrf.mxu0
        %v659 = vpop.f32.mrf.mxu0
        %660 = vdwg.mxu0
        %v661 = vadd.f32 %v602, %v656
        %s662 = scalar_lea.vmem %s2, 12
        %v663 = vld [vmem:[%s662] sm:$0x3]
        %v665 = vsel %vm347, %v337, 0
        %v668 = vsel %vm351, %v663, 0
        %670 = vmatprep.subr.bf16.mxu0 0
        %671 = vmatpush1.bf16.msra.mxu0 0
        %672 = vmatprep.subr.bf16.mxu0 0
        %673 = vmatpush1.bf16.msra.mxu0 0
        %674 = vmatprep.subr.bf16.mxu0 0
        %675 = vmatpush1.bf16.msra.mxu0 0
        %676 = vmatprep.subr.bf16.mxu0 0
        %677 = vmatpush1.bf16.msra.mxu0 0
        %678 = vmatprep.subr.bf16.mxu0 0
        %679 = vmatpush1.bf16.msra.mxu0 0
        %680 = vmatprep.subr.bf16.mxu0 0
        %681 = vmatpush1.bf16.msra.mxu0 0
        %682 = vmatprep.subr.bf16.mxu0 0
        %683 = vmatpush1.bf16.msra.mxu0 0
        %684 = vmatprep.subr.bf16.mxu0 0
        %685 = vmatpush1.bf16.msra.mxu0 %v668
        %686 = vmatprep.subr.bf16.mxu0 0
        %687 = vmatpush2.bf16.msra.mxu0 0
        %688 = vmatprep.subr.bf16.mxu0 0
        %689 = vmatpush2.bf16.msra.mxu0 0
        %690 = vmatprep.subr.bf16.mxu0 0
        %691 = vmatpush2.bf16.msra.mxu0 0
        %692 = vmatprep.subr.bf16.mxu0 0
        %693 = vmatpush2.bf16.msra.mxu0 0
        %694 = vmatprep.subr.bf16.mxu0 0
        %695 = vmatpush2.bf16.msra.mxu0 0
        %696 = vmatprep.subr.bf16.mxu0 0
        %697 = vmatpush2.bf16.msra.mxu0 0
        %698 = vmatprep.subr.bf16.mxu0 0
        %699 = vmatpush2.bf16.msra.mxu0 0
        %700 = vmatprep.subr.bf16.mxu0 0
        %701 = vmatpush2.bf16.msra.mxu0 0
        %702 = vmatprep.mubr.bf16.mxu0 0
        %703 = vmatmul.mubr.bf16.gmra.mxu0 %v665
        %v704 = vpop.f32.mrf.mxu0
        %v705 = vadd.f32 0.0, %v704
        %v706 = vpop.f32.mrf.mxu0
        %v707 = vpop.f32.mrf.mxu0
        %v708 = vpop.f32.mrf.mxu0
        %709 = vdwg.mxu0
        %v710 = vadd.f32 %v661, %v705
        %s711 = scalar_lea.vmem %s2, 14
        %v712 = vld [vmem:[%s711] sm:$0x3]
        %v714 = vunpack.c.l.b16 %v337
        %v715 = vpack.c.b16 %v714, %v714
        %716 = vrot.lane.b32.xlu0 %v715, 124
        %v717 = vpop.permute.xlu0 %716
        %v719 = vsel %vm347, %v717, 0
        %v722 = vsel %vm351, %v712, 0
        %724 = vmatprep.subr.bf16.mxu0 0
        %725 = vmatpush1.bf16.msra.mxu0 0
        %726 = vmatprep.subr.bf16.mxu0 0
        %727 = vmatpush1.bf16.msra.mxu0 0
        %728 = vmatprep.subr.bf16.mxu0 0
        %729 = vmatpush1.bf16.msra.mxu0 0
        %730 = vmatprep.subr.bf16.mxu0 0
        %731 = vmatpush1.bf16.msra.mxu0 0
        %732 = vmatprep.subr.bf16.mxu0 0
        %733 = vmatpush1.bf16.msra.mxu0 0
        %734 = vmatprep.subr.bf16.mxu0 0
        %735 = vmatpush1.bf16.msra.mxu0 0
        %736 = vmatprep.subr.bf16.mxu0 0
        %737 = vmatpush1.bf16.msra.mxu0 0
        %738 = vmatprep.subr.bf16.mxu0 0
        %739 = vmatpush1.bf16.msra.mxu0 %v722
        %740 = vmatprep.subr.bf16.mxu0 0
        %741 = vmatpush2.bf16.msra.mxu0 0
        %742 = vmatprep.subr.bf16.mxu0 0
        %743 = vmatpush2.bf16.msra.mxu0 0
        %744 = vmatprep.subr.bf16.mxu0 0
        %745 = vmatpush2.bf16.msra.mxu0 0
        %746 = vmatprep.subr.bf16.mxu0 0
        %747 = vmatpush2.bf16.msra.mxu0 0
        %748 = vmatprep.subr.bf16.mxu0 0
        %749 = vmatpush2.bf16.msra.mxu0 0
        %750 = vmatprep.subr.bf16.mxu0 0
        %751 = vmatpush2.bf16.msra.mxu0 0
        %752 = vmatprep.subr.bf16.mxu0 0
        %753 = vmatpush2.bf16.msra.mxu0 0
        %754 = vmatprep.subr.bf16.mxu0 0
        %755 = vmatpush2.bf16.msra.mxu0 0
        %756 = vmatprep.mubr.bf16.mxu0 0
        %757 = vmatmul.mubr.bf16.gmra.mxu0 %v719
        %v758 = vpop.f32.mrf.mxu0
        %v759 = vadd.f32 0.0, %v758
        %v760 = vpop.f32.mrf.mxu0
        %v761 = vpop.f32.mrf.mxu0
        %v762 = vpop.f32.mrf.mxu0
        %763 = vdwg.mxu0
        %v764 = vadd.f32 %v710, %v759
        %s765 = scalar_lea.vmem %s2, 16
        %v766 = vld [vmem:[%s765] sm:$0x3]
        %v768 = vunpack.c.l.b16 %v338
        %v769 = vpack.c.b16 %v768, %v714
        %v771 = vshrl.u32 %v769, 16
        %v773 = vshll.u32 %v769, 16
        %v775 = vrot.slane %v773, 1
        %v776 = vor.u32 %v771, %v775
        %v778 = vsel %vm347, %v776, 0
        %v781 = vsel %vm351, %v766, 0
        %783 = vmatprep.subr.bf16.mxu0 0
        %784 = vmatpush1.bf16.msra.mxu0 0
        %785 = vmatprep.subr.bf16.mxu0 0
        %786 = vmatpush1.bf16.msra.mxu0 0
        %787 = vmatprep.subr.bf16.mxu0 0
        %788 = vmatpush1.bf16.msra.mxu0 0
        %789 = vmatprep.subr.bf16.mxu0 0
        %790 = vmatpush1.bf16.msra.mxu0 0
        %791 = vmatprep.subr.bf16.mxu0 0
        %792 = vmatpush1.bf16.msra.mxu0 0
        %793 = vmatprep.subr.bf16.mxu0 0
        %794 = vmatpush1.bf16.msra.mxu0 0
        %795 = vmatprep.subr.bf16.mxu0 0
        %796 = vmatpush1.bf16.msra.mxu0 0
        %797 = vmatprep.subr.bf16.mxu0 0
        %798 = vmatpush1.bf16.msra.mxu0 %v781
        %799 = vmatprep.subr.bf16.mxu0 0
        %800 = vmatpush2.bf16.msra.mxu0 0
        %801 = vmatprep.subr.bf16.mxu0 0
        %802 = vmatpush2.bf16.msra.mxu0 0
        %803 = vmatprep.subr.bf16.mxu0 0
        %804 = vmatpush2.bf16.msra.mxu0 0
        %805 = vmatprep.subr.bf16.mxu0 0
        %806 = vmatpush2.bf16.msra.mxu0 0
        %807 = vmatprep.subr.bf16.mxu0 0
        %808 = vmatpush2.bf16.msra.mxu0 0
        %809 = vmatprep.subr.bf16.mxu0 0
        %810 = vmatpush2.bf16.msra.mxu0 0
        %811 = vmatprep.subr.bf16.mxu0 0
        %812 = vmatpush2.bf16.msra.mxu0 0
        %813 = vmatprep.subr.bf16.mxu0 0
        %814 = vmatpush2.bf16.msra.mxu0 0
        %815 = vmatprep.mubr.bf16.mxu0 0
        %816 = vmatmul.mubr.bf16.gmra.mxu0 %v778
        %v817 = vpop.f32.mrf.mxu0
        %v818 = vadd.f32 0.0, %v817
        %v819 = vpop.f32.mrf.mxu0
        %v820 = vpop.f32.mrf.mxu0
        %v821 = vpop.f32.mrf.mxu0
        %822 = vdwg.mxu0
        %v823 = vadd.f32 %v764, %v818
        %v825 = vlaneseq
        %v826 = vshrl.u32 %v825, 7
        %v827 = vsub.s32 0, %v826
        %v828 = vrot.slane %v314, %v827
        %v830 = vadd.f32 %v823, %v828
        %s831 = smul.u32 %s316, 8
        %s832 = scalar_lea.vmem %s311, %s831
        %833 = vst.msk [vmem:[%s832] sm:$0xff] %vm347, %v830
      $region41: #{tpu_custom_call.1} parent=35 // loop_footer
        %s320 = sadd.s32 1, %s316
      $region42: #{tpu_custom_call.1} parent=35 // loop_footer_branch
        %315 = sbr.rel target = $region38
      $region43: #{tpu_custom_call.1} parent=35 // loop_exit
        _
      %s834 = scalar_lea.vmem %s283, 48
      %v835 = vld [vmem:[%s834] sm:$0xf]
      %v836 = vld [vmem:[%s834 + $0x4] sm:$0x1]
      %s837 = scalar_lea.vmem %s283, 56
      %v838 = vld [vmem:[%s837] sm:$0xf]
      %v839 = vld [vmem:[%s837 + $0x4] sm:$0x1]
      %v840 = vld [vmem:[%s300] sm:$0xf]
      %v841 = vld [vmem:[%s300 + $0x4] sm:$0x1]
      %v842 = vld [vmem:[%s2] sm:$0x3]
      %s843 = scalar_lea.vmem %s2, 2
      %v844 = vld [vmem:[%s843] sm:$0x3]
      %v846 = vunpack.c.l.b16 %v835
      %v847 = vpack.c.b16 %v846, %v846
      %848 = vrot.lane.b32.xlu0 %v847, 124
      %v849 = vpop.permute.xlu0 %848
      %vm850 = vcmask 31744
      %v852 = vsel %vm850, %v849, 0
      %vm854 = vcmask 1041408
      %v856 = vsel %vm854, %v844, 0
      %858 = vmatprep.subr.bf16.mxu0 0
      %859 = vmatpush1.bf16.msra.mxu0 0
      %860 = vmatprep.subr.bf16.mxu0 0
      %861 = vmatpush1.bf16.msra.mxu0 0
      %862 = vmatprep.subr.bf16.mxu0 0
      %863 = vmatpush1.bf16.msra.mxu0 0
      %864 = vmatprep.subr.bf16.mxu0 0
      %865 = vmatpush1.bf16.msra.mxu0 0
      %866 = vmatprep.subr.bf16.mxu0 0
      %867 = vmatpush1.bf16.msra.mxu0 0
      %868 = vmatprep.subr.bf16.mxu0 0
      %869 = vmatpush1.bf16.msra.mxu0 0
      %870 = vmatprep.subr.bf16.mxu0 0
      %871 = vmatpush1.bf16.msra.mxu0 0
      %872 = vmatprep.subr.bf16.mxu0 0
      %873 = vmatpush1.bf16.msra.mxu0 %v856
      %874 = vmatprep.subr.bf16.mxu0 0
      %875 = vmatpush2.bf16.msra.mxu0 0
      %876 = vmatprep.subr.bf16.mxu0 0
      %877 = vmatpush2.bf16.msra.mxu0 0
      %878 = vmatprep.subr.bf16.mxu0 0
      %879 = vmatpush2.bf16.msra.mxu0 0
      %880 = vmatprep.subr.bf16.mxu0 0
      %881 = vmatpush2.bf16.msra.mxu0 0
      %882 = vmatprep.subr.bf16.mxu0 0
      %883 = vmatpush2.bf16.msra.mxu0 0
      %884 = vmatprep.subr.bf16.mxu0 0
      %885 = vmatpush2.bf16.msra.mxu0 0
      %886 = vmatprep.subr.bf16.mxu0 0
      %887 = vmatpush2.bf16.msra.mxu0 0
      %888 = vmatprep.subr.bf16.mxu0 0
      %889 = vmatpush2.bf16.msra.mxu0 0
      %890 = vmatprep.mubr.bf16.mxu0 0
      %891 = vmatmul.mubr.bf16.gmra.mxu0 %v852
      %v892 = vpop.f32.mrf.mxu0
      %v893 = vadd.f32 0.0, %v892
      %v894 = vpop.f32.mrf.mxu0
      %v895 = vpop.f32.mrf.mxu0
      %v896 = vpop.f32.mrf.mxu0
      %897 = vdwg.mxu0
      %v899 = vsel %vm850, %v835, 0
      %v902 = vsel %vm854, %v842, 0
      %904 = vmatprep.subr.bf16.mxu0 0
      %905 = vmatpush1.bf16.msra.mxu0 0
      %906 = vmatprep.subr.bf16.mxu0 0
      %907 = vmatpush1.bf16.msra.mxu0 0
      %908 = vmatprep.subr.bf16.mxu0 0
      %909 = vmatpush1.bf16.msra.mxu0 0
      %910 = vmatprep.subr.bf16.mxu0 0
      %911 = vmatpush1.bf16.msra.mxu0 0
      %912 = vmatprep.subr.bf16.mxu0 0
      %913 = vmatpush1.bf16.msra.mxu0 0
      %914 = vmatprep.subr.bf16.mxu0 0
      %915 = vmatpush1.bf16.msra.mxu0 0
      %916 = vmatprep.subr.bf16.mxu0 0
      %917 = vmatpush1.bf16.msra.mxu0 0
      %918 = vmatprep.subr.bf16.mxu0 0
      %919 = vmatpush1.bf16.msra.mxu0 %v902
      %920 = vmatprep.subr.bf16.mxu0 0
      %921 = vmatpush2.bf16.msra.mxu0 0
      %922 = vmatprep.subr.bf16.mxu0 0
      %923 = vmatpush2.bf16.msra.mxu0 0
      %924 = vmatprep.subr.bf16.mxu0 0
      %925 = vmatpush2.bf16.msra.mxu0 0
      %926 = vmatprep.subr.bf16.mxu0 0
      %927 = vmatpush2.bf16.msra.mxu0 0
      %928 = vmatprep.subr.bf16.mxu0 0
      %929 = vmatpush2.bf16.msra.mxu0 0
      %930 = vmatprep.subr.bf16.mxu0 0
      %931 = vmatpush2.bf16.msra.mxu0 0
      %932 = vmatprep.subr.bf16.mxu0 0
      %933 = vmatpush2.bf16.msra.mxu0 0
      %934 = vmatprep.subr.bf16.mxu0 0
      %935 = vmatpush2.bf16.msra.mxu0 0
      %936 = vmatprep.mubr.bf16.mxu0 0
      %937 = vmatmul.mubr.bf16.gmra.mxu0 %v899
      %v938 = vpop.f32.mrf.mxu0
      %v939 = vadd.f32 %v893, %v938
      %v940 = vpop.f32.mrf.mxu0
      %v941 = vpop.f32.mrf.mxu0
      %v942 = vpop.f32.mrf.mxu0
      %943 = vdwg.mxu0
      %s944 = scalar_lea.vmem %s2, 4
      %v945 = vld [vmem:[%s944] sm:$0x3]
      %v947 = vunpack.c.l.b16 %v836
      %v948 = vpack.c.b16 %v947, %v846
      %v950 = vshrl.u32 %v948, 16
      %v952 = vshll.u32 %v948, 16
      %v954 = vrot.slane %v952, 1
      %v955 = vor.u32 %v950, %v954
      %v957 = vsel %vm850, %v955, 0
      %v960 = vsel %vm854, %v945, 0
      %962 = vmatprep.subr.bf16.mxu0 0
      %963 = vmatpush1.bf16.msra.mxu0 0
      %964 = vmatprep.subr.bf16.mxu0 0
      %965 = vmatpush1.bf16.msra.mxu0 0
      %966 = vmatprep.subr.bf16.mxu0 0
      %967 = vmatpush1.bf16.msra.mxu0 0
      %968 = vmatprep.subr.bf16.mxu0 0
      %969 = vmatpush1.bf16.msra.mxu0 0
      %970 = vmatprep.subr.bf16.mxu0 0
      %971 = vmatpush1.bf16.msra.mxu0 0
      %972 = vmatprep.subr.bf16.mxu0 0
      %973 = vmatpush1.bf16.msra.mxu0 0
      %974 = vmatprep.subr.bf16.mxu0 0
      %975 = vmatpush1.bf16.msra.mxu0 0
      %976 = vmatprep.subr.bf16.mxu0 0
      %977 = vmatpush1.bf16.msra.mxu0 %v960
      %978 = vmatprep.subr.bf16.mxu0 0
      %979 = vmatpush2.bf16.msra.mxu0 0
      %980 = vmatprep.subr.bf16.mxu0 0
      %981 = vmatpush2.bf16.msra.mxu0 0
      %982 = vmatprep.subr.bf16.mxu0 0
      %983 = vmatpush2.bf16.msra.mxu0 0
      %984 = vmatprep.subr.bf16.mxu0 0
      %985 = vmatpush2.bf16.msra.mxu0 0
      %986 = vmatprep.subr.bf16.mxu0 0
      %987 = vmatpush2.bf16.msra.mxu0 0
      %988 = vmatprep.subr.bf16.mxu0 0
      %989 = vmatpush2.bf16.msra.mxu0 0
      %990 = vmatprep.subr.bf16.mxu0 0
      %991 = vmatpush2.bf16.msra.mxu0 0
      %992 = vmatprep.subr.bf16.mxu0 0
      %993 = vmatpush2.bf16.msra.mxu0 0
      %994 = vmatprep.mubr.bf16.mxu0 0
      %995 = vmatmul.mubr.bf16.gmra.mxu0 %v957
      %v996 = vpop.f32.mrf.mxu0
      %v997 = vadd.f32 0.0, %v996
      %v998 = vpop.f32.mrf.mxu0
      %v999 = vpop.f32.mrf.mxu0
      %v1000 = vpop.f32.mrf.mxu0
      %1001 = vdwg.mxu0
      %v1002 = vadd.f32 %v939, %v997
      %s1003 = scalar_lea.vmem %s2, 6
      %v1004 = vld [vmem:[%s1003] sm:$0x3]
      %v1006 = vsel %vm850, %v838, 0
      %v1009 = vsel %vm854, %v1004, 0
      %1011 = vmatprep.subr.bf16.mxu0 0
      %1012 = vmatpush1.bf16.msra.mxu0 0
      %1013 = vmatprep.subr.bf16.mxu0 0
      %1014 = vmatpush1.bf16.msra.mxu0 0
      %1015 = vmatprep.subr.bf16.mxu0 0
      %1016 = vmatpush1.bf16.msra.mxu0 0
      %1017 = vmatprep.subr.bf16.mxu0 0
      %1018 = vmatpush1.bf16.msra.mxu0 0
      %1019 = vmatprep.subr.bf16.mxu0 0
      %1020 = vmatpush1.bf16.msra.mxu0 0
      %1021 = vmatprep.subr.bf16.mxu0 0
      %1022 = vmatpush1.bf16.msra.mxu0 0
      %1023 = vmatprep.subr.bf16.mxu0 0
      %1024 = vmatpush1.bf16.msra.mxu0 0
      %1025 = vmatprep.subr.bf16.mxu0 0
      %1026 = vmatpush1.bf16.msra.mxu0 %v1009
      %1027 = vmatprep.subr.bf16.mxu0 0
      %1028 = vmatpush2.bf16.msra.mxu0 0
      %1029 = vmatprep.subr.bf16.mxu0 0
      %1030 = vmatpush2.bf16.msra.mxu0 0
      %1031 = vmatprep.subr.bf16.mxu0 0
      %1032 = vmatpush2.bf16.msra.mxu0 0
      %1033 = vmatprep.subr.bf16.mxu0 0
      %1034 = vmatpush2.bf16.msra.mxu0 0
      %1035 = vmatprep.subr.bf16.mxu0 0
      %1036 = vmatpush2.bf16.msra.mxu0 0
      %1037 = vmatprep.subr.bf16.mxu0 0
      %1038 = vmatpush2.bf16.msra.mxu0 0
      %1039 = vmatprep.subr.bf16.mxu0 0
      %1040 = vmatpush2.bf16.msra.mxu0 0
      %1041 = vmatprep.subr.bf16.mxu0 0
      %1042 = vmatpush2.bf16.msra.mxu0 0
      %1043 = vmatprep.mubr.bf16.mxu0 0
      %1044 = vmatmul.mubr.bf16.gmra.mxu0 %v1006
      %v1045 = vpop.f32.mrf.mxu0
      %v1046 = vadd.f32 0.0, %v1045
      %v1047 = vpop.f32.mrf.mxu0
      %v1048 = vpop.f32.mrf.mxu0
      %v1049 = vpop.f32.mrf.mxu0
      %1050 = vdwg.mxu0
      %v1051 = vadd.f32 %v1002, %v1046
      %s1052 = scalar_lea.vmem %s2, 8
      %v1053 = vld [vmem:[%s1052] sm:$0x3]
      %v1055 = vunpack.c.l.b16 %v838
      %v1056 = vpack.c.b16 %v1055, %v1055
      %1057 = vrot.lane.b32.xlu0 %v1056, 124
      %v1058 = vpop.permute.xlu0 %1057
      %v1060 = vsel %vm850, %v1058, 0
      %v1063 = vsel %vm854, %v1053, 0
      %1065 = vmatprep.subr.bf16.mxu0 0
      %1066 = vmatpush1.bf16.msra.mxu0 0
      %1067 = vmatprep.subr.bf16.mxu0 0
      %1068 = vmatpush1.bf16.msra.mxu0 0
      %1069 = vmatprep.subr.bf16.mxu0 0
      %1070 = vmatpush1.bf16.msra.mxu0 0
      %1071 = vmatprep.subr.bf16.mxu0 0
      %1072 = vmatpush1.bf16.msra.mxu0 0
      %1073 = vmatprep.subr.bf16.mxu0 0
      %1074 = vmatpush1.bf16.msra.mxu0 0
      %1075 = vmatprep.subr.bf16.mxu0 0
      %1076 = vmatpush1.bf16.msra.mxu0 0
      %1077 = vmatprep.subr.bf16.mxu0 0
      %1078 = vmatpush1.bf16.msra.mxu0 0
      %1079 = vmatprep.subr.bf16.mxu0 0
      %1080 = vmatpush1.bf16.msra.mxu0 %v1063
      %1081 = vmatprep.subr.bf16.mxu0 0
      %1082 = vmatpush2.bf16.msra.mxu0 0
      %1083 = vmatprep.subr.bf16.mxu0 0
      %1084 = vmatpush2.bf16.msra.mxu0 0
      %1085 = vmatprep.subr.bf16.mxu0 0
      %1086 = vmatpush2.bf16.msra.mxu0 0
      %1087 = vmatprep.subr.bf16.mxu0 0
      %1088 = vmatpush2.bf16.msra.mxu0 0
      %1089 = vmatprep.subr.bf16.mxu0 0
      %1090 = vmatpush2.bf16.msra.mxu0 0
      %1091 = vmatprep.subr.bf16.mxu0 0
      %1092 = vmatpush2.bf16.msra.mxu0 0
      %1093 = vmatprep.subr.bf16.mxu0 0
      %1094 = vmatpush2.bf16.msra.mxu0 0
      %1095 = vmatprep.subr.bf16.mxu0 0
      %1096 = vmatpush2.bf16.msra.mxu0 0
      %1097 = vmatprep.mubr.bf16.mxu0 0
      %1098 = vmatmul.mubr.bf16.gmra.mxu0 %v1060
      %v1099 = vpop.f32.mrf.mxu0
      %v1100 = vadd.f32 0.0, %v1099
      %v1101 = vpop.f32.mrf.mxu0
      %v1102 = vpop.f32.mrf.mxu0
      %v1103 = vpop.f32.mrf.mxu0
      %1104 = vdwg.mxu0
      %v1105 = vadd.f32 %v1051, %v1100
      %s1106 = scalar_lea.vmem %s2, 10
      %v1107 = vld [vmem:[%s1106] sm:$0x3]
      %v1109 = vunpack.c.l.b16 %v839
      %v1110 = vpack.c.b16 %v1109, %v1055
      %v1112 = vshrl.u32 %v1110, 16
      %v1114 = vshll.u32 %v1110, 16
      %v1116 = vrot.slane %v1114, 1
      %v1117 = vor.u32 %v1112, %v1116
      %v1119 = vsel %vm850, %v1117, 0
      %v1122 = vsel %vm854, %v1107, 0
      %1124 = vmatprep.subr.bf16.mxu0 0
      %1125 = vmatpush1.bf16.msra.mxu0 0
      %1126 = vmatprep.subr.bf16.mxu0 0
      %1127 = vmatpush1.bf16.msra.mxu0 0
      %1128 = vmatprep.subr.bf16.mxu0 0
      %1129 = vmatpush1.bf16.msra.mxu0 0
      %1130 = vmatprep.subr.bf16.mxu0 0
      %1131 = vmatpush1.bf16.msra.mxu0 0
      %1132 = vmatprep.subr.bf16.mxu0 0
      %1133 = vmatpush1.bf16.msra.mxu0 0
      %1134 = vmatprep.subr.bf16.mxu0 0
      %1135 = vmatpush1.bf16.msra.mxu0 0
      %1136 = vmatprep.subr.bf16.mxu0 0
      %1137 = vmatpush1.bf16.msra.mxu0 0
      %1138 = vmatprep.subr.bf16.mxu0 0
      %1139 = vmatpush1.bf16.msra.mxu0 %v1122
      %1140 = vmatprep.subr.bf16.mxu0 0
      %1141 = vmatpush2.bf16.msra.mxu0 0
      %1142 = vmatprep.subr.bf16.mxu0 0
      %1143 = vmatpush2.bf16.msra.mxu0 0
      %1144 = vmatprep.subr.bf16.mxu0 0
      %1145 = vmatpush2.bf16.msra.mxu0 0
      %1146 = vmatprep.subr.bf16.mxu0 0
      %1147 = vmatpush2.bf16.msra.mxu0 0
      %1148 = vmatprep.subr.bf16.mxu0 0
      %1149 = vmatpush2.bf16.msra.mxu0 0
      %1150 = vmatprep.subr.bf16.mxu0 0
      %1151 = vmatpush2.bf16.msra.mxu0 0
      %1152 = vmatprep.subr.bf16.mxu0 0
      %1153 = vmatpush2.bf16.msra.mxu0 0
      %1154 = vmatprep.subr.bf16.mxu0 0
      %1155 = vmatpush2.bf16.msra.mxu0 0
      %1156 = vmatprep.mubr.bf16.mxu0 0
      %1157 = vmatmul.mubr.bf16.gmra.mxu0 %v1119
      %v1158 = vpop.f32.mrf.mxu0
      %v1159 = vadd.f32 0.0, %v1158
      %v1160 = vpop.f32.mrf.mxu0
      %v1161 = vpop.f32.mrf.mxu0
      %v1162 = vpop.f32.mrf.mxu0
      %1163 = vdwg.mxu0
      %v1164 = vadd.f32 %v1105, %v1159
      %s1165 = scalar_lea.vmem %s2, 12
      %v1166 = vld [vmem:[%s1165] sm:$0x3]
      %v1168 = vsel %vm850, %v840, 0
      %v1171 = vsel %vm854, %v1166, 0
      %1173 = vmatprep.subr.bf16.mxu0 0
      %1174 = vmatpush1.bf16.msra.mxu0 0
      %1175 = vmatprep.subr.bf16.mxu0 0
      %1176 = vmatpush1.bf16.msra.mxu0 0
      %1177 = vmatprep.subr.bf16.mxu0 0
      %1178 = vmatpush1.bf16.msra.mxu0 0
      %1179 = vmatprep.subr.bf16.mxu0 0
      %1180 = vmatpush1.bf16.msra.mxu0 0
      %1181 = vmatprep.subr.bf16.mxu0 0
      %1182 = vmatpush1.bf16.msra.mxu0 0
      %1183 = vmatprep.subr.bf16.mxu0 0
      %1184 = vmatpush1.bf16.msra.mxu0 0
      %1185 = vmatprep.subr.bf16.mxu0 0
      %1186 = vmatpush1.bf16.msra.mxu0 0
      %1187 = vmatprep.subr.bf16.mxu0 0
      %1188 = vmatpush1.bf16.msra.mxu0 %v1171
      %1189 = vmatprep.subr.bf16.mxu0 0
      %1190 = vmatpush2.bf16.msra.mxu0 0
      %1191 = vmatprep.subr.bf16.mxu0 0
      %1192 = vmatpush2.bf16.msra.mxu0 0
      %1193 = vmatprep.subr.bf16.mxu0 0
      %1194 = vmatpush2.bf16.msra.mxu0 0
      %1195 = vmatprep.subr.bf16.mxu0 0
      %1196 = vmatpush2.bf16.msra.mxu0 0
      %1197 = vmatprep.subr.bf16.mxu0 0
      %1198 = vmatpush2.bf16.msra.mxu0 0
      %1199 = vmatprep.subr.bf16.mxu0 0
      %1200 = vmatpush2.bf16.msra.mxu0 0
      %1201 = vmatprep.subr.bf16.mxu0 0
      %1202 = vmatpush2.bf16.msra.mxu0 0
      %1203 = vmatprep.subr.bf16.mxu0 0
      %1204 = vmatpush2.bf16.msra.mxu0 0
      %1205 = vmatprep.mubr.bf16.mxu0 0
      %1206 = vmatmul.mubr.bf16.gmra.mxu0 %v1168
      %v1207 = vpop.f32.mrf.mxu0
      %v1208 = vadd.f32 0.0, %v1207
      %v1209 = vpop.f32.mrf.mxu0
      %v1210 = vpop.f32.mrf.mxu0
      %v1211 = vpop.f32.mrf.mxu0
      %1212 = vdwg.mxu0
      %v1213 = vadd.f32 %v1164, %v1208
      %s1214 = scalar_lea.vmem %s2, 14
      %v1215 = vld [vmem:[%s1214] sm:$0x3]
      %v1217 = vunpack.c.l.b16 %v840
      %v1218 = vpack.c.b16 %v1217, %v1217
      %1219 = vrot.lane.b32.xlu0 %v1218, 124
      %v1220 = vpop.permute.xlu0 %1219
      %v1222 = vsel %vm850, %v1220, 0
      %v1225 = vsel %vm854, %v1215, 0
      %1227 = vmatprep.subr.bf16.mxu0 0
      %1228 = vmatpush1.bf16.msra.mxu0 0
      %1229 = vmatprep.subr.bf16.mxu0 0
      %1230 = vmatpush1.bf16.msra.mxu0 0
      %1231 = vmatprep.subr.bf16.mxu0 0
      %1232 = vmatpush1.bf16.msra.mxu0 0
      %1233 = vmatprep.subr.bf16.mxu0 0
      %1234 = vmatpush1.bf16.msra.mxu0 0
      %1235 = vmatprep.subr.bf16.mxu0 0
      %1236 = vmatpush1.bf16.msra.mxu0 0
      %1237 = vmatprep.subr.bf16.mxu0 0
      %1238 = vmatpush1.bf16.msra.mxu0 0
      %1239 = vmatprep.subr.bf16.mxu0 0
      %1240 = vmatpush1.bf16.msra.mxu0 0
      %1241 = vmatprep.subr.bf16.mxu0 0
      %1242 = vmatpush1.bf16.msra.mxu0 %v1225
      %1243 = vmatprep.subr.bf16.mxu0 0
      %1244 = vmatpush2.bf16.msra.mxu0 0
      %1245 = vmatprep.subr.bf16.mxu0 0
      %1246 = vmatpush2.bf16.msra.mxu0 0
      %1247 = vmatprep.subr.bf16.mxu0 0
      %1248 = vmatpush2.bf16.msra.mxu0 0
      %1249 = vmatprep.subr.bf16.mxu0 0
      %1250 = vmatpush2.bf16.msra.mxu0 0
      %1251 = vmatprep.subr.bf16.mxu0 0
      %1252 = vmatpush2.bf16.msra.mxu0 0
      %1253 = vmatprep.subr.bf16.mxu0 0
      %1254 = vmatpush2.bf16.msra.mxu0 0
      %1255 = vmatprep.subr.bf16.mxu0 0
      %1256 = vmatpush2.bf16.msra.mxu0 0
      %1257 = vmatprep.subr.bf16.mxu0 0
      %1258 = vmatpush2.bf16.msra.mxu0 0
      %1259 = vmatprep.mubr.bf16.mxu0 0
      %1260 = vmatmul.mubr.bf16.gmra.mxu0 %v1222
      %v1261 = vpop.f32.mrf.mxu0
      %v1262 = vadd.f32 0.0, %v1261
      %v1263 = vpop.f32.mrf.mxu0
      %v1264 = vpop.f32.mrf.mxu0
      %v1265 = vpop.f32.mrf.mxu0
      %1266 = vdwg.mxu0
      %v1267 = vadd.f32 %v1213, %v1262
      %s1268 = scalar_lea.vmem %s2, 16
      %v1269 = vld [vmem:[%s1268] sm:$0x3]
      %v1271 = vunpack.c.l.b16 %v841
      %v1272 = vpack.c.b16 %v1271, %v1217
      %v1274 = vshrl.u32 %v1272, 16
      %v1276 = vshll.u32 %v1272, 16
      %v1278 = vrot.slane %v1276, 1
      %v1279 = vor.u32 %v1274, %v1278
      %v1281 = vsel %vm850, %v1279, 0
      %v1284 = vsel %vm854, %v1269, 0
      %1286 = vmatprep.subr.bf16.mxu0 0
      %1287 = vmatpush1.bf16.msra.mxu0 0
      %1288 = vmatprep.subr.bf16.mxu0 0
      %1289 = vmatpush1.bf16.msra.mxu0 0
      %1290 = vmatprep.subr.bf16.mxu0 0
      %1291 = vmatpush1.bf16.msra.mxu0 0
      %1292 = vmatprep.subr.bf16.mxu0 0
      %1293 = vmatpush1.bf16.msra.mxu0 0
      %1294 = vmatprep.subr.bf16.mxu0 0
      %1295 = vmatpush1.bf16.msra.mxu0 0
      %1296 = vmatprep.subr.bf16.mxu0 0
      %1297 = vmatpush1.bf16.msra.mxu0 0
      %1298 = vmatprep.subr.bf16.mxu0 0
      %1299 = vmatpush1.bf16.msra.mxu0 0
      %1300 = vmatprep.subr.bf16.mxu0 0
      %1301 = vmatpush1.bf16.msra.mxu0 %v1284
      %1302 = vmatprep.subr.bf16.mxu0 0
      %1303 = vmatpush2.bf16.msra.mxu0 0
      %1304 = vmatprep.subr.bf16.mxu0 0
      %1305 = vmatpush2.bf16.msra.mxu0 0
      %1306 = vmatprep.subr.bf16.mxu0 0
      %1307 = vmatpush2.bf16.msra.mxu0 0
      %1308 = vmatprep.subr.bf16.mxu0 0
      %1309 = vmatpush2.bf16.msra.mxu0 0
      %1310 = vmatprep.subr.bf16.mxu0 0
      %1311 = vmatpush2.bf16.msra.mxu0 0
      %1312 = vmatprep.subr.bf16.mxu0 0
      %1313 = vmatpush2.bf16.msra.mxu0 0
      %1314 = vmatprep.subr.bf16.mxu0 0
      %1315 = vmatpush2.bf16.msra.mxu0 0
      %1316 = vmatprep.subr.bf16.mxu0 0
      %1317 = vmatpush2.bf16.msra.mxu0 0
      %1318 = vmatprep.mubr.bf16.mxu0 0
      %1319 = vmatmul.mubr.bf16.gmra.mxu0 %v1281
      %v1320 = vpop.f32.mrf.mxu0
      %v1321 = vadd.f32 0.0, %v1320
      %v1322 = vpop.f32.mrf.mxu0
      %v1323 = vpop.f32.mrf.mxu0
      %v1324 = vpop.f32.mrf.mxu0
      %1325 = vdwg.mxu0
      %v1326 = vadd.f32 %v1267, %v1321
      %v1328 = vlaneseq
      %v1329 = vshrl.u32 %v1328, 7
      %v1330 = vsub.s32 0, %v1329
      %v1331 = vrot.slane %v314, %v1330
      %v1333 = vadd.f32 %v1326, %v1331
      %s1334 = scalar_lea.vmem %s311, 24
      %1335 = vst.msk [vmem:[%s1334] sm:$0xff] %vm850, %v1333
      %s1336 = smul.u32 4, %s20
      %p1337 = scmp.lt.s32.totalorder %s19, 1
      %s1338 = scalar_select %p1337, %s19, 1
      %p1339 = scmp.lt.s32.totalorder %s1336, 7
      %s1340 = scalar_select %p1339, %s1336, 7
      %s1341 = smul.addr %s1338, 8
      %s1342 = sadd.s32 %s1340, %s1341
      %s1343 = smul.addr %s1342, 8
      %s1344 = scalar_lea.vmem %s4, %s1343
      // Predicated region
      $region44: #{tpu_custom_call.1} parent=35 // pred_check
        %p1345 = pneg %p149
      $region45: #{tpu_custom_call.1} parent=35 // pred_check_branch
        %1347 = sbr.rel (%p1345) target = $region47
      $region46: #{tpu_custom_call.1} parent=35 // pred_region
        %s1348 = smul.u32 4, %s20
      $region47: #{tpu_custom_call.1} parent=35 // pred_fallthru
        _
    $region36: #{tpu_custom_call.1} parent=5 // pred_fallthru
      _
    %p1349 = scmp.le.s32.totalorder 2, %s10
    // Predicated region
    $region48: #{tpu_custom_call.1} parent=5 // pred_check
      %p1350 = pneg %p1349
    $region49: #{tpu_custom_call.1} parent=5 // pred_check_branch
      %1352 = sbr.rel (%p1350) target = $region51
    $region50: #{tpu_custom_call.1} parent=5 // pred_region
      %s1353 = ssub.s32 %s10, 2
      // Predicated region
      $region52: #{tpu_custom_call.1} parent=50 // pred_check
        %p1354 = pneg %p155
      $region53: #{tpu_custom_call.1} parent=50 // pred_check_branch
        %1356 = sbr.rel (%p1354) target = $region55
      $region54: #{tpu_custom_call.1} parent=50 // pred_region
        %s1357 = smul.u32 4, %s22
        %p1358 = scmp.lt.s32.totalorder %s21, 1
        %s1359 = scalar_select %p1358, %s21, 1
        %p1360 = scmp.lt.s32.totalorder %s1357, 7
        %s1361 = scalar_select %p1360, %s1357, 7
        %s1362 = smul.addr %s1359, 8
        %s1363 = sadd.s32 %s1361, %s1362
        %s1364 = smul.addr %s1363, 8
        %s1365 = scalar_lea.vmem %s4, %s1364
      $region55: #{tpu_custom_call.1} parent=50 // pred_fallthru
        _
    $region51: #{tpu_custom_call.1} parent=5 // pred_fallthru
      _
  $region6: #{tpu_custom_call.1} parent=0 // loop_footer
    %s14 = sadd.s32 1, %s10
  $region7: #{tpu_custom_call.1} parent=0 // loop_footer_branch
    %9 = sbr.rel target = $region3
  $region8: #{tpu_custom_call.1} parent=0 // loop_exit
    _

</llo_original>
